<compile_context>
chip_gen: v7x
topology: tpu7x:2x2x1
jax: 0.10.0
libtpu: 0.0.40
codegen_flags: <defaults>
</compile_context>

<pallas_src>
import functools
import math

import jax
import jax.numpy as jnp
from jax.experimental import pallas as pl
from jax.experimental.pallas import tpu as pltpu


# ----------------------------- helpers --------------------------------------

_TM_PREF, _TN_PREF, _TK_PREF = 512, 512, 512
_VMEM_LIMIT = 48 * 1024 * 1024   # < v7x 64 MiB physical, > 32 MiB scoped default


def _gelu(x):
    c = math.sqrt(2.0 / math.pi)
    return 0.5 * x * (1.0 + jnp.tanh(c * (x + 0.044715 * x * x * x)))


def _round_up(x, m):
    return ((x + m - 1) // m) * m


def _tile_and_pad(dim, pref, align):
    """Pick (tile, padded_dim) so padded_dim % tile == 0 and tile <= pref.

    1. dim <= pref          -> one full-dim block, no padding.
    2. aligned divisor<=pref -> that tile, no padding.
    3. otherwise            -> tile = pref, pad dim up to a multiple of it
       (replaces the old full-dim fallback that blew VMEM for vocab-sized dims).
    """
    if dim <= pref:
        return dim, dim
    t = (pref // align) * align
    while t >= align:
        if dim % t == 0:
            return t, dim
        t -= align
    t = (pref // align) * align
    return t, _round_up(dim, t)


def _pad2(a, rows, cols):
    r, c = a.shape
    if (r, c) == (rows, cols):
        return a
    return jnp.pad(a, ((0, rows - r), (0, cols - c)))


# ----------------------------- Pallas kernels -------------------------------

def _matmul_kernel(x_ref, w_ref, b_ref, o_ref, acc_ref, *, activation, n_k):
    """Tiled y = act(x @ w + b); bf16 inputs, f32 VMEM accumulation."""
    @pl.when(pl.program_id(2) == 0)
    def _():
        acc_ref[...] = jnp.zeros_like(acc_ref)

    acc_ref[...] += jnp.dot(x_ref[...], w_ref[...],
                            preferred_element_type=jnp.float32)

    @pl.when(pl.program_id(2) == n_k - 1)
    def _():
        y = acc_ref[...] + b_ref[...]
        if activation == "relu":
            y = jnp.maximum(y, 0.0)
        elif activation == "gelu":
            y = _gelu(y)
        elif activation == "tanh":
            y = jnp.tanh(y)
        o_ref[...] = y.astype(o_ref.dtype)


def linear(x, w, b=None, activation=None, out_dtype=jnp.bfloat16):
    """y = act(x @ w + b); x:(M,K) w:(K,N) b:(N,).  Emits bf16 by default."""
    m, kd = x.shape
    n = w.shape[1]
    if b is None:
        b = jnp.zeros((n,), jnp.float32)
    tm, mp = _tile_and_pad(m, _TM_PREF, 16)     # 16: bf16 sublane packing
    tn, np_ = _tile_and_pad(n, _TN_PREF, 128)
    tk, kp = _tile_and_pad(kd, _TK_PREF, 128)
    xp = _pad2(x.astype(jnp.bfloat16), mp, kp)
    wp = _pad2(w.astype(jnp.bfloat16), kp, np_)
    bp = _pad2(b.reshape(1, n).astype(jnp.float32), 1, np_)
    grid = (mp // tm, np_ // tn, kp // tk)
    out = pl.pallas_call(
        functools.partial(_matmul_kernel, activation=activation, n_k=grid[2]),
        grid=grid,
        in_specs=[
            pl.BlockSpec((tm, tk), lambda i, j, k: (i, k)),
            pl.BlockSpec((tk, tn), lambda i, j, k: (k, j)),
            pl.BlockSpec((1, tn), lambda i, j, k: (0, j)),
        ],
        out_specs=pl.BlockSpec((tm, tn), lambda i, j, k: (i, j)),
        out_shape=jax.ShapeDtypeStruct((mp, np_), out_dtype),
        scratch_shapes=[pltpu.VMEM((tm, tn), jnp.float32)],
        compiler_params=pltpu.CompilerParams(
            dimension_semantics=("parallel", "parallel", "arbitrary")),
    )(xp, wp, bp)
    if (mp, np_) != (m, n):
        out = out[:m, :n]
    return out


def _matmul_nt_kernel(x_ref, w_ref, b_ref, o_ref, acc_ref, *, n_k):
    """Tiled y = x @ w.T + b with w stored as (N, K) (tied decoder weight)."""
    @pl.when(pl.program_id(2) == 0)
    def _():
        acc_ref[...] = jnp.zeros_like(acc_ref)

    acc_ref[...] += jax.lax.dot_general(
        x_ref[...], w_ref[...],
        dimension_numbers=(((1,), (1,)), ((), ())),
        preferred_element_type=jnp.float32)

    @pl.when(pl.program_id(2) == n_k - 1)
    def _():
        o_ref[...] = (acc_ref[...] + b_ref[...]).astype(o_ref.dtype)


def linear_nt(x, w_nk, b):
    """y = x @ w_nk.T + b; the vocab (N) axis is tiled/padded -> bounded VMEM."""
    m, kd = x.shape
    n = w_nk.shape[0]
    tm, mp = _tile_and_pad(m, _TM_PREF, 16)
    tn, np_ = _tile_and_pad(n, _TN_PREF, 128)
    tk, kp = _tile_and_pad(kd, _TK_PREF, 128)
    xp = _pad2(x.astype(jnp.bfloat16), mp, kp)
    wp = _pad2(w_nk.astype(jnp.bfloat16), np_, kp)
    bp = _pad2(b.reshape(1, n).astype(jnp.float32), 1, np_)
    grid = (mp // tm, np_ // tn, kp // tk)
    out = pl.pallas_call(
        functools.partial(_matmul_nt_kernel, n_k=grid[2]),
        grid=grid,
        in_specs=[
            pl.BlockSpec((tm, tk), lambda i, j, k: (i, k)),
            pl.BlockSpec((tn, tk), lambda i, j, k: (j, k)),
            pl.BlockSpec((1, tn), lambda i, j, k: (0, j)),
        ],
        out_specs=pl.BlockSpec((tm, tn), lambda i, j, k: (i, j)),
        out_shape=jax.ShapeDtypeStruct((mp, np_), jnp.float32),
        scratch_shapes=[pltpu.VMEM((tm, tn), jnp.float32)],
        compiler_params=pltpu.CompilerParams(
            dimension_semantics=("parallel", "parallel", "arbitrary"),
            vmem_limit_bytes=_VMEM_LIMIT),
    )(xp, wp, bp)
    if (mp, np_) != (m, n):
        out = out[:m, :n]
    return out


def _matmul_res_ln_kernel(x_ref, w_ref, b_ref, r_ref, g_ref, bb_ref,
                          o_ref, acc_ref, *, eps, n_k):
    """Fused y = LayerNorm(x @ w + b + residual) * gamma + beta (bf16 out)."""
    @pl.when(pl.program_id(1) == 0)
    def _():
        acc_ref[...] = jnp.zeros_like(acc_ref)

    acc_ref[...] += jnp.dot(x_ref[...], w_ref[...],
                            preferred_element_type=jnp.float32)

    @pl.when(pl.program_id(1) == n_k - 1)
    def _():
        y = acc_ref[...] + b_ref[...] + r_ref[...].astype(jnp.float32)
        mu = jnp.mean(y, axis=-1, keepdims=True)
        var = jnp.mean(jnp.square(y - mu), axis=-1, keepdims=True)
        o_ref[...] = ((y - mu) * jax.lax.rsqrt(var + eps) * g_ref[...]
                      + bb_ref[...]).astype(o_ref.dtype)


def linear_residual_layernorm(x, w, b, residual, gamma, beta, eps=1e-5,
                              out_dtype=jnp.bfloat16):
    """LayerNorm((x @ w + b) + residual); LN needs the full output dim per row."""
    m, kd = x.shape
    d = w.shape[1]
    tm, mp = _tile_and_pad(m, 256, 16)
    tk, kp = _tile_and_pad(kd, _TK_PREF, 128)
    xp = _pad2(x.astype(jnp.bfloat16), mp, kp)
    wp = _pad2(w.astype(jnp.bfloat16), kp, d)
    rp = _pad2(residual.astype(jnp.bfloat16), mp, d)
    grid = (mp // tm, kp // tk)
    out = pl.pallas_call(
        functools.partial(_matmul_res_ln_kernel, eps=eps, n_k=grid[1]),
        grid=grid,
        in_specs=[
            pl.BlockSpec((tm, tk), lambda i, k: (i, k)),
            pl.BlockSpec((tk, d), lambda i, k: (k, 0)),
            pl.BlockSpec((1, d), lambda i, k: (0, 0)),
            pl.BlockSpec((tm, d), lambda i, k: (i, 0)),
            pl.BlockSpec((1, d), lambda i, k: (0, 0)),
            pl.BlockSpec((1, d), lambda i, k: (0, 0)),
        ],
        out_specs=pl.BlockSpec((tm, d), lambda i, k: (i, 0)),
        out_shape=jax.ShapeDtypeStruct((mp, d), out_dtype),
        scratch_shapes=[pltpu.VMEM((tm, d), jnp.float32)],
        compiler_params=pltpu.CompilerParams(
            dimension_semantics=("parallel", "arbitrary"),
            vmem_limit_bytes=_VMEM_LIMIT),
    )(xp, wp, b.reshape(1, d).astype(jnp.float32), rp,
      gamma.reshape(1, d).astype(jnp.float32),
      beta.reshape(1, d).astype(jnp.float32))
    if mp != m:
        out = out[:m]
    return out


def _ln_kernel(x_ref, g_ref, b_ref, o_ref, *, eps):
    x = x_ref[...].astype(jnp.float32)
    mu = jnp.mean(x, axis=-1, keepdims=True)
    var = jnp.mean(jnp.square(x - mu), axis=-1, keepdims=True)
    o_ref[...] = ((x - mu) * jax.lax.rsqrt(var + eps) * g_ref[...]
                  + b_ref[...]).astype(o_ref.dtype)


def layernorm(x, gamma, beta, eps=1e-5, out_dtype=jnp.bfloat16):
    """Row-tiled LayerNorm over the last dim (stats in f32, bf16 out)."""
    n, d = x.shape
    tm, np_ = _tile_and_pad(n, _TM_PREF, 16)
    xp = _pad2(x, np_, d)
    out = pl.pallas_call(
        functools.partial(_ln_kernel, eps=eps),
        grid=(np_ // tm,),
        in_specs=[
            pl.BlockSpec((tm, d), lambda i: (i, 0)),
            pl.BlockSpec((1, d), lambda i: (0, 0)),
            pl.BlockSpec((1, d), lambda i: (0, 0)),
        ],
        out_specs=pl.BlockSpec((tm, d), lambda i: (i, 0)),
        out_shape=jax.ShapeDtypeStruct((np_, d), out_dtype),
        compiler_params=pltpu.CompilerParams(
            dimension_semantics=("parallel",)),
    )(xp, gamma.reshape(1, d).astype(jnp.float32),
      beta.reshape(1, d).astype(jnp.float32))
    if np_ != n:
        out = out[:n]
    return out


def _attn_kernel(qkv_ref, bias_ref, wo_ref, bo_ref, res_ref, g_ref, b_ref,
                 o_ref, acc_ref, *, scale, eps, n_h):
    """Fused per-(batch, head) attention + output proj + residual + LayerNorm.

    Grid = (B, H); the (S, D) f32 accumulator is resident across the H axis,
    so the only temporaries per step are one (S, S) score tile; the HBM output
    block is lane-dense (1, S, D) and written once per batch element.
    """
    h = pl.program_id(1)

    @pl.when(h == 0)
    def _():
        acc_ref[...] = jnp.zeros_like(acc_ref)

    q = qkv_ref[0, :, 0, 0, :]          # (S, Dh) bf16
    k = qkv_ref[0, :, 0, 1, :]          # (S, Dh) bf16
    v = qkv_ref[0, :, 0, 2, :]          # (S, Dh) bf16

    sc = jax.lax.dot_general(q, k, (((1,), (1,)), ((), ())),
                             preferred_element_type=jnp.float32) * scale
    sc = sc + bias_ref[0]               # (1, S) additive pad-mask bias
    sc = sc - jnp.max(sc, axis=-1, keepdims=True)
    p = jnp.exp(sc)
    inv = pl.reciprocal(jnp.sum(p, axis=-1, keepdims=True), approx=True)
    ctx = jnp.dot((p * inv).astype(v.dtype), v,
                  preferred_element_type=jnp.float32)          # (S, Dh)
    # fold this head's output projection into the resident (S, D) accumulator
    acc_ref[...] += jnp.dot(ctx.astype(jnp.bfloat16), wo_ref[h],
                            preferred_element_type=jnp.float32)

    @pl.when(h == n_h - 1)
    def _():
        y = acc_ref[...] + bo_ref[...] + res_ref[0].astype(jnp.float32)
        mu = jnp.mean(y, axis=-1, keepdims=True)
        var = jnp.mean(jnp.square(y - mu), axis=-1, keepdims=True)
        o_ref[0] = ((y - mu) * jax.lax.rsqrt(var + eps) * g_ref[...]
                    + b_ref[...]).astype(o_ref.dtype)


def attention_block(qkv5, attn_bias, wo3, bo, residual, gamma, beta,
                    *, scale, eps=1e-5):
    """qkv5: (B, S, H, 3, Dh) bf16 (straight reshape of the fused QKV matmul).

    Returns LayerNorm(attention_output @ Wo + bo + residual): (B, S, D) bf16.
    """
    b, s, h, _, dh = qkv5.shape
    d = h * dh
    return pl.pallas_call(
        functools.partial(_attn_kernel, scale=scale, eps=eps, n_h=h),
        grid=(b, h),
        in_specs=[
            pl.BlockSpec((1, s, 1, 3, dh), lambda i, j: (i, 0, j, 0, 0)),
            pl.BlockSpec((1, 1, s), lambda i, j: (i, 0, 0)),
            pl.BlockSpec((h, dh, d), lambda i, j: (0, 0, 0)),   # resident once
            pl.BlockSpec((1, d), lambda i, j: (0, 0)),
            pl.BlockSpec((1, s, d), lambda i, j: (i, 0, 0)),
            pl.BlockSpec((1, d), lambda i, j: (0, 0)),
            pl.BlockSpec((1, d), lambda i, j: (0, 0)),
        ],
        out_specs=pl.BlockSpec((1, s, d), lambda i, j: (i, 0, 0)),
        out_shape=jax.ShapeDtypeStruct((b, s, d), jnp.bfloat16),
        scratch_shapes=[pltpu.VMEM((s, d), jnp.float32)],
        compiler_params=pltpu.CompilerParams(
            dimension_semantics=("parallel", "arbitrary"),
            vmem_limit_bytes=_VMEM_LIMIT),
    )(qkv5, attn_bias, wo3,
      bo.reshape(1, d).astype(jnp.float32), residual,
      gamma.reshape(1, d).astype(jnp.float32),
      beta.reshape(1, d).astype(jnp.float32))


# ----------------------------- Parameter init -------------------------------

def _xavier_normal(key, shape):
    fan_in, fan_out = shape[0], shape[1]
    std = math.sqrt(2.0 / (fan_in + fan_out))
    return std * jax.random.normal(key, shape, jnp.float32)


def _sinusoidal_pe(n_position, d_model):
    pos = jnp.arange(n_position, dtype=jnp.float32)[:, None]
    i = jnp.arange(d_model)[None, :]
    angle = pos / jnp.power(10000.0, (2 * (i // 2)).astype(jnp.float32) / d_model)
    return jnp.where(i % 2 == 0, jnp.sin(angle), jnp.cos(angle)).astype(jnp.float32)


def init_params(key, n_vocab, d_model, heads, ff_d_ff, n_layers, n_position):
    dh = d_model // heads
    keys = iter(jax.random.split(key, 4 + 6 * n_layers))
    p = {
        "wte": _xavier_normal(next(keys), (n_vocab, d_model)),      # f32 (tied)
        "spe": _xavier_normal(next(keys), (2, d_model)),
        "pe": _sinusoidal_pe(n_position, d_model),
        "wc": _xavier_normal(next(keys), (d_model, 2)),
        "bc": jnp.zeros((2,), jnp.float32),
        "w_lin": _xavier_normal(next(keys), (d_model, d_model)).astype(jnp.bfloat16),
        "b_lin": jnp.zeros((d_model,), jnp.float32),
        "norm_g": jnp.ones((d_model,), jnp.float32),
        "norm_b": jnp.zeros((d_model,), jnp.float32),
        "decoder_bias": jnp.zeros((n_vocab,), jnp.float32),
        "layers": [],
    }
    for _ in range(n_layers):
        wq = _xavier_normal(next(keys), (d_model, d_model))
        wk = _xavier_normal(next(keys), (d_model, d_model))
        wv = _xavier_normal(next(keys), (d_model, d_model))
        # fused QKV weight with columns ordered (head, {q,k,v}, Dh) so the
        # projection output reshapes for free to (B, S, H, 3, Dh).
        wqkv = jnp.concatenate(
            [wq.reshape(d_model, heads, 1, dh),
             wk.reshape(d_model, heads, 1, dh),
             wv.reshape(d_model, heads, 1, dh)], axis=2
        ).reshape(d_model, 3 * d_model)
        wo = _xavier_normal(next(keys), (d_model, d_model))
        p["layers"].append({
            "wqkv": wqkv.astype(jnp.bfloat16),                  # pre-cast once
            "bqkv": jnp.zeros((3 * d_model,), jnp.float32),
            "wo3": wo.reshape(heads, dh, d_model).astype(jnp.bfloat16),
            "bo": jnp.zeros((d_model,), jnp.float32),
            "w1": _xavier_normal(next(keys), (d_model, ff_d_ff)).astype(jnp.bfloat16),
            "b1": jnp.zeros((ff_d_ff,), jnp.float32),
            "w2": _xavier_normal(next(keys), (ff_d_ff, d_model)).astype(jnp.bfloat16),
            "b2": jnp.zeros((d_model,), jnp.float32),
            "ln1_g": jnp.ones((d_model,), jnp.float32),
            "ln1_b": jnp.zeros((d_model,), jnp.float32),
            "ln2_g": jnp.ones((d_model,), jnp.float32),
            "ln2_b": jnp.zeros((d_model,), jnp.float32),
        })
    return p


# ------------------------------ Forward pass --------------------------------

def bert_forward(params, input_ids, segment_ids, masked_position,
                 *, d_model, heads, pad_idx):
    B, S = input_ids.shape
    H = heads
    Dh = d_model // H
    scale = 1.0 / math.sqrt(Dh)

    # embeddings + fixed positional encoding (plain-JAX gathers, f32)
    x = params["wte"][input_ids] + params["spe"][segment_ids]
    x = x + params["pe"][:S][None, :, :]

    # additive attention bias: 0 for valid keys, -1e9 where the key is pad_idx.
    attn_bias = jnp.where(input_ids == pad_idx,
                          jnp.float32(-1e9), jnp.float32(0.0))[:, None, :]

    # bf16 residual stream (matmul accumulation / LN stats stay f32)
    x2 = x.reshape(B * S, d_model).astype(jnp.bfloat16)
    for lp in params["layers"]:
        # fused QKV projection (one matmul, bf16 out)
        qkv = linear(x2, lp["wqkv"], lp["bqkv"])               # (B*S, 3D)
        qkv5 = qkv.reshape(B, S, H, 3, Dh)                     # free reshape
        # fused attention + output proj + residual + LayerNorm
        x2 = attention_block(qkv5, attn_bias, lp["wo3"], lp["bo"],
                             x2.reshape(B, S, d_model),
                             lp["ln1_g"], lp["ln1_b"],
                             scale=scale).reshape(B * S, d_model)
        # feed-forward (ff_activation = ReLU), bf16 out
        ff = linear(x2, lp["w1"], lp["b1"], activation="relu")
        # fused: FF2 + residual + LayerNorm
        x2 = linear_residual_layernorm(ff, lp["w2"], lp["b2"], x2,
                                       lp["ln2_g"], lp["ln2_b"])

    encoded = x2.reshape(B, S, d_model).astype(jnp.float32)

    # classification head: tanh(encoded[:, 0]) -> Linear(d_model, 2)
    # (tiny GEMM: plain JAX / XLA beats a pallas_call at this size)
    pooling = jnp.tanh(encoded[:, 0])
    logits_classifier = pooling @ params["wc"] + params["bc"]

    # masked-LM head
    M = masked_position.shape[1]
    masked = jnp.take_along_axis(encoded, masked_position[:, :, None], axis=1)
    m2 = masked.reshape(B * M, d_model)
    m2 = linear(m2, params["w_lin"], params["b_lin"], activation="gelu")
    m2 = layernorm(m2, params["norm_g"], params["norm_b"])
    # decoder weight tied to wte (n_vocab, d_model): contract over d_model
    # in-kernel (no wte.T copy); vocab axis tiled/padded -> bounded VMEM.
    logits_lm = linear_nt(m2, params["wte"], params["decoder_bias"])
    logits_lm = logits_lm.reshape(B, M, -1)

    return logits_lm, logits_classifier, encoded


# --------------------------------- Driver ------------------------------------

if __name__ == "__main__":
    N_VOCAB, PAD_IDX = 64, 0
    D_MODEL, HEADS, FF_D_FF, N_LAYERS, N_POSITION = 32, 4, 64, 2, 64
    B, S, M = 2, 8, 4

    key = jax.random.PRNGKey(0)
    kp, k1 = jax.random.split(key)
    params = init_params(kp, N_VOCAB, D_MODEL, HEADS, FF_D_FF, N_LAYERS, N_POSITION)

    input_ids = jax.random.randint(k1, (B, S), 1, N_VOCAB, dtype=jnp.int32)
    input_ids = input_ids.at[:, -2:].set(PAD_IDX)                  # some pad tokens
    segment_ids = jnp.concatenate(
        [jnp.zeros((B, S // 2), jnp.int32), jnp.ones((B, S - S // 2), jnp.int32)],
        axis=1)
    masked_position = jnp.array([[1, 3, 4, 5], [0, 2, 3, 6]], dtype=jnp.int32)

    forward = jax.jit(functools.partial(
        bert_forward, d_model=D_MODEL, heads=HEADS, pad_idx=PAD_IDX))

    logits_lm, logits_cls, encoded = forward(
        params, input_ids, segment_ids, masked_position)
    jax.block_until_ready((logits_lm, logits_cls, encoded))

    assert logits_lm.shape == (B, M, N_VOCAB)
    assert logits_cls.shape == (B, 2)
    assert encoded.shape == (B, S, D_MODEL)
    print("KERNEL_OK")
</pallas_src>

<mosaic_0001>
module attributes {stable_mosaic.version = 11 : i64} {
  func.func @_matmul_kernel(%arg0: i32, %arg1: i32, %arg2: i32, %arg3: memref<16x32xbf16, #tpu.memory_space<vmem>>, %arg4: memref<32x96xbf16, #tpu.memory_space<vmem>>, %arg5: memref<1x96xf32, #tpu.memory_space<vmem>>, %arg6: memref<16x96xbf16, #tpu.memory_space<vmem>>, %arg7: memref<16x96xf32, #tpu.memory_space<vmem>>) attributes {dimension_semantics = [#tpu.dimension_semantics<parallel>, #tpu.dimension_semantics<parallel>, #tpu.dimension_semantics<arbitrary>], iteration_bounds = array<i64: 1, 1, 1>, scalar_prefetch = 0 : i64, scratch_operands = 1 : i64, tpu.core_type = #tpu.core_type<tc>, window_params = [{transform_indices = @transform_0, window_bounds = array<i64: 16, 32>}, {transform_indices = @transform_1, window_bounds = array<i64: 32, 96>}, {transform_indices = @transform_2, window_bounds = array<i64: 1, 96>}, {transform_indices = @transform_3, window_bounds = array<i64: 16, 96>}]} {
    %c0_i32 = arith.constant 0 : i32
    %0 = arith.cmpi eq, %arg2, %c0_i32 : i32
    %1 = arith.extui %0 : i1 to i32
    %c0_i32_0 = arith.constant 0 : i32
    %2 = arith.cmpi ne, %1, %c0_i32_0 : i32
    scf.if %2 {
      %cst_10 = arith.constant 0.000000e+00 : f32
      %12 = vector.broadcast %cst_10 : f32 to vector<16x96xf32>
      %c0_11 = arith.constant 0 : index
      %c0_12 = arith.constant 0 : index
      %13 = vector.load %arg7[%c0_11, %c0_12] : memref<16x96xf32, #tpu.memory_space<vmem>>, vector<16x96xf32>
      tpu.vector_store %arg7[%c0_11, %c0_12], %12 {strides = array<i32>} : memref<16x96xf32, #tpu.memory_space<vmem>>, vector<16x96xf32>,
    } else {
    }
    %c0 = arith.constant 0 : index
    %c0_1 = arith.constant 0 : index
    %3 = vector.load %arg7[%c0, %c0_1] : memref<16x96xf32, #tpu.memory_space<vmem>>, vector<16x96xf32>
    %c0_2 = arith.constant 0 : index
    %c0_3 = arith.constant 0 : index
    %4 = vector.load %arg3[%c0_2, %c0_3] : memref<16x32xbf16, #tpu.memory_space<vmem>>, vector<16x32xbf16>
    %c0_4 = arith.constant 0 : index
    %c0_5 = arith.constant 0 : index
    %5 = vector.load %arg4[%c0_4, %c0_5] : memref<32x96xbf16, #tpu.memory_space<vmem>>, vector<32x96xbf16>
    %cst = arith.constant dense<0.000000e+00> : vector<16x96xf32>
    %6 = tpu.matmul %4, %5, %cst {dimension_numbers = #tpu.dot_dimension_numbers<[1], [0], [0], [1], [0, 0, 1, 1], [], []>} : vector<16x32xbf16>, vector<32x96xbf16>, vector<16x96xf32> -> vector<16x96xf32>
    %7 = arith.addf %3, %6 : vector<16x96xf32>
    %c0_6 = arith.constant 0 : index
    %c0_7 = arith.constant 0 : index
    %8 = vector.load %arg7[%c0_6, %c0_7] : memref<16x96xf32, #tpu.memory_space<vmem>>, vector<16x96xf32>
    tpu.vector_store %arg7[%c0_6, %c0_7], %7 {strides = array<i32>} : memref<16x96xf32, #tpu.memory_space<vmem>>, vector<16x96xf32>,
    %c0_i32_8 = arith.constant 0 : i32
    %9 = arith.cmpi eq, %arg2, %c0_i32_8 : i32
    %10 = arith.extui %9 : i1 to i32
    %c0_i32_9 = arith.constant 0 : i32
    %11 = arith.cmpi ne, %10, %c0_i32_9 : i32
    scf.if %11 {
      %c0_10 = arith.constant 0 : index
      %c0_11 = arith.constant 0 : index
      %12 = vector.load %arg7[%c0_10, %c0_11] : memref<16x96xf32, #tpu.memory_space<vmem>>, vector<16x96xf32>
      %c0_12 = arith.constant 0 : index
      %c0_13 = arith.constant 0 : index
      %13 = vector.load %arg5[%c0_12, %c0_13] : memref<1x96xf32, #tpu.memory_space<vmem>>, vector<1x96xf32>
      %14 = vector.broadcast %13 : vector<1x96xf32> to vector<16x96xf32>
      %15 = arith.addf %12, %14 : vector<16x96xf32>
      %16 = arith.truncf %15 : vector<16x96xf32> to vector<16x96xbf16>
      %c0_14 = arith.constant 0 : index
      %c0_15 = arith.constant 0 : index
      %17 = vector.load %arg6[%c0_14, %c0_15] : memref<16x96xbf16, #tpu.memory_space<vmem>>, vector<16x96xbf16>
      tpu.vector_store %arg6[%c0_14, %c0_15], %16 {strides = array<i32>} : memref<16x96xbf16, #tpu.memory_space<vmem>>, vector<16x96xbf16>,
    } else {
    }
    return
  }
  func.func @transform_0(%arg0: i32, %arg1: i32, %arg2: i32) -> (i32, i32) {
    %c0_i32 = arith.constant 0 : i32
    return %arg0, %arg2 : i32, i32
  }
  func.func @transform_1(%arg0: i32, %arg1: i32, %arg2: i32) -> (i32, i32) {
    %c0_i32 = arith.constant 0 : i32
    return %arg2, %arg1 : i32, i32
  }
  func.func @transform_2(%arg0: i32, %arg1: i32, %arg2: i32) -> (i32, i32) {
    %c0_i32 = arith.constant 0 : i32
    %c0_i32_0 = arith.constant 0 : i32
    return %c0_i32, %arg1 : i32, i32
  }
  func.func @transform_3(%arg0: i32, %arg1: i32, %arg2: i32) -> (i32, i32) {
    %c0_i32 = arith.constant 0 : i32
    return %arg0, %arg1 : i32, i32
  }
}

module attributes {stable_mosaic.version = 11 : i64} {
  func.func @_attn_kernel(%arg0: i32, %arg1: i32, %arg2: memref<1x8x1x3x8xbf16, #tpu.memory_space<vmem>>, %arg3: memref<1x1x8xf32, #tpu.memory_space<vmem>>, %arg4: memref<4x8x32xbf16, #tpu.memory_space<vmem>>, %arg5: memref<1x32xf32, #tpu.memory_space<vmem>>, %arg6: memref<1x8x32xbf16, #tpu.memory_space<vmem>>, %arg7: memref<1x32xf32, #tpu.memory_space<vmem>>, %arg8: memref<1x32xf32, #tpu.memory_space<vmem>>, %arg9: memref<1x8x32xbf16, #tpu.memory_space<vmem>>, %arg10: memref<8x32xf32, #tpu.memory_space<vmem>>) attributes {dimension_semantics = [#tpu.dimension_semantics<parallel>, #tpu.dimension_semantics<arbitrary>], iteration_bounds = array<i64: 2, 4>, scalar_prefetch = 0 : i64, scratch_operands = 1 : i64, tpu.core_type = #tpu.core_type<tc>, window_params = [{transform_indices = @transform_0, window_bounds = array<i64: 1, 8, 1, 3, 8>}, {transform_indices = @transform_1, window_bounds = array<i64: 1, 1, 8>}, {pipeline_mode = #tpu.pipeline_mode<synchronous>, transform_indices = @transform_2, window_bounds = array<i64: 4, 8, 32>}, {pipeline_mode = #tpu.pipeline_mode<synchronous>, transform_indices = @transform_3, window_bounds = array<i64: 1, 32>}, {transform_indices = @transform_4, window_bounds = array<i64: 1, 8, 32>}, {pipeline_mode = #tpu.pipeline_mode<synchronous>, transform_indices = @transform_5, window_bounds = array<i64: 1, 32>}, {pipeline_mode = #tpu.pipeline_mode<synchronous>, transform_indices = @transform_6, window_bounds = array<i64: 1, 32>}, {transform_indices = @transform_7, window_bounds = array<i64: 1, 8, 32>}]} {
    %c0_i32 = arith.constant 0 : i32
    %0 = arith.cmpi eq, %arg1, %c0_i32 : i32
    %1 = arith.extui %0 : i1 to i32
    %c0_i32_0 = arith.constant 0 : i32
    %2 = arith.cmpi ne, %1, %c0_i32_0 : i32
    scf.if %2 {
      %cst_28 = arith.constant 0.000000e+00 : f32
      %39 = vector.broadcast %cst_28 : f32 to vector<8x32xf32>
      %c0_29 = arith.constant 0 : index
      %c0_30 = arith.constant 0 : index
      %40 = vector.load %arg10[%c0_29, %c0_30] : memref<8x32xf32, #tpu.memory_space<vmem>>, vector<8x32xf32>
      tpu.vector_store %arg10[%c0_29, %c0_30], %39 {strides = array<i32>} : memref<8x32xf32, #tpu.memory_space<vmem>>, vector<8x32xf32>,
    } else {
    }
    %c0 = arith.constant 0 : index
    %c0_1 = arith.constant 0 : index
    %c0_2 = arith.constant 0 : index
    %c0_3 = arith.constant 0 : index
    %c0_4 = arith.constant 0 : index
    %3 = vector.load %arg2[%c0, %c0_1, %c0_2, %c0_3, %c0_4] : memref<1x8x1x3x8xbf16, #tpu.memory_space<vmem>>, vector<1x8x1x1x8xbf16>
    %4 = vector.shape_cast %3 : vector<1x8x1x1x8xbf16> to vector<8x8xbf16>
    %c0_5 = arith.constant 0 : index
    %c0_6 = arith.constant 0 : index
    %c0_7 = arith.constant 0 : index
    %c1 = arith.constant 1 : index
    %c0_8 = arith.constant 0 : index
    %5 = vector.load %arg2[%c0_5, %c0_6, %c0_7, %c1, %c0_8] : memref<1x8x1x3x8xbf16, #tpu.memory_space<vmem>>, vector<1x8x1x1x8xbf16>
    %6 = vector.shape_cast %5 : vector<1x8x1x1x8xbf16> to vector<8x8xbf16>
    %c0_9 = arith.constant 0 : index
    %c0_10 = arith.constant 0 : index
    %c0_11 = arith.constant 0 : index
    %c2 = arith.constant 2 : index
    %c0_12 = arith.constant 0 : index
    %7 = vector.load %arg2[%c0_9, %c0_10, %c0_11, %c2, %c0_12] : memref<1x8x1x3x8xbf16, #tpu.memory_space<vmem>>, vector<1x8x1x1x8xbf16>
    %8 = vector.shape_cast %7 : vector<1x8x1x1x8xbf16> to vector<8x8xbf16>
    %cst = arith.constant dense<0.000000e+00> : vector<8x8xf32>
    %9 = tpu.matmul %4, %6, %cst {dimension_numbers = #tpu.dot_dimension_numbers<[1], [1], [0], [0], [0, 0, 1, 0], [], []>} : vector<8x8xbf16>, vector<8x8xbf16>, vector<8x8xf32> -> vector<8x8xf32>
    %cst_13 = arith.constant 0.353553385 : f32
    %10 = vector.broadcast %cst_13 : f32 to vector<8x8xf32>
    %11 = arith.mulf %9, %10 : vector<8x8xf32>
    %c0_14 = arith.constant 0 : index
    %c0_15 = arith.constant 0 : index
    %c0_16 = arith.constant 0 : index
    %12 = vector.load %arg3[%c0_14, %c0_15, %c0_16] : memref<1x1x8xf32, #tpu.memory_space<vmem>>, vector<1x1x8xf32>
    %13 = vector.shape_cast %12 : vector<1x1x8xf32> to vector<1x8xf32>
    %14 = vector.broadcast %13 : vector<1x8xf32> to vector<8x8xf32>
    %15 = arith.addf %11, %14 : vector<8x8xf32>
    %cst_17 = arith.constant dense<0xFF800000> : vector<8xf32>
    %16 = vector.multi_reduction <maximumf>, %15, %cst_17 [1] : vector<8x8xf32> to vector<8xf32>
    %17 = vector.shape_cast %16 : vector<8xf32> to vector<8x1xf32>
    %18 = vector.broadcast %17 : vector<8x1xf32> to vector<8x8xf32>
    %19 = arith.subf %15, %18 : vector<8x8xf32>
    %20 = math.exp %19 : vector<8x8xf32>
    %cst_18 = arith.constant dense<0.000000e+00> : vector<8xf32>
    %21 = vector.multi_reduction <add>, %20, %cst_18 [1] : vector<8x8xf32> to vector<8xf32>
    %22 = vector.shape_cast %21 : vector<8xf32> to vector<8x1xf32>
    %23 = tpu.reciprocal %22 {approx = true} : vector<8x1xf32> -> vector<8x1xf32>
    %24 = vector.broadcast %23 : vector<8x1xf32> to vector<8x8xf32>
    %25 = arith.mulf %20, %24 : vector<8x8xf32>
    %26 = arith.truncf %25 : vector<8x8xf32> to vector<8x8xbf16>
    %cst_19 = arith.constant dense<0.000000e+00> : vector<8x8xf32>
    %27 = tpu.matmul %26, %8, %cst_19 {dimension_numbers = #tpu.dot_dimension_numbers<[1], [0], [0], [1], [0, 0, 1, 1], [], []>} : vector<8x8xbf16>, vector<8x8xbf16>, vector<8x8xf32> -> vector<8x8xf32>
    %c0_20 = arith.constant 0 : index
    %c0_21 = arith.constant 0 : index
    %28 = vector.load %arg10[%c0_20, %c0_21] : memref<8x32xf32, #tpu.memory_space<vmem>>, vector<8x32xf32>
    %29 = arith.truncf %27 : vector<8x8xf32> to vector<8x8xbf16>
    %30 = arith.index_cast %arg1 : i32 to index
    %c0_22 = arith.constant 0 : index
    %c0_23 = arith.constant 0 : index
    %31 = vector.load %arg4[%30, %c0_22, %c0_23] : memref<4x8x32xbf16, #tpu.memory_space<vmem>>, vector<1x8x32xbf16>
    %32 = vector.shape_cast %31 : vector<1x8x32xbf16> to vector<8x32xbf16>
    %cst_24 = arith.constant dense<0.000000e+00> : vector<8x32xf32>
    %33 = tpu.matmul %29, %32, %cst_24 {dimension_numbers = #tpu.dot_dimension_numbers<[1], [0], [0], [1], [0, 0, 1, 1], [], []>} : vector<8x8xbf16>, vector<8x32xbf16>, vector<8x32xf32> -> vector<8x32xf32>
    %34 = arith.addf %28, %33 : vector<8x32xf32>
    %c0_25 = arith.constant 0 : index
    %c0_26 = arith.constant 0 : index
    %35 = vector.load %arg10[%c0_25, %c0_26] : memref<8x32xf32, #tpu.memory_space<vmem>>, vector<8x32xf32>
    tpu.vector_store %arg10[%c0_25, %c0_26], %34 {strides = array<i32>} : memref<8x32xf32, #tpu.memory_space<vmem>>, vector<8x32xf32>,
    %c3_i32 = arith.constant 3 : i32
    %36 = arith.cmpi eq, %arg1, %c3_i32 : i32
    %37 = arith.extui %36 : i1 to i32
    %c0_i32_27 = arith.constant 0 : i32
    %38 = arith.cmpi ne, %37, %c0_i32_27 : i32
    scf.if %38 {
      %c0_28 = arith.constant 0 : index
      %c0_29 = arith.constant 0 : index
      %39 = vector.load %arg10[%c0_28, %c0_29] : memref<8x32xf32, #tpu.memory_space<vmem>>, vector<8x32xf32>
      %c0_30 = arith.constant 0 : index
      %c0_31 = arith.constant 0 : index
      %40 = vector.load %arg5[%c0_30, %c0_31] : memref<1x32xf32, #tpu.memory_space<vmem>>, vector<1x32xf32>
      %41 = vector.broadcast %40 : vector<1x32xf32> to vector<8x32xf32>
      %42 = arith.addf %39, %41 : vector<8x32xf32>
      %c0_32 = arith.constant 0 : index
      %c0_33 = arith.constant 0 : index
      %c0_34 = arith.constant 0 : index
      %43 = vector.load %arg6[%c0_32, %c0_33, %c0_34] : memref<1x8x32xbf16, #tpu.memory_space<vmem>>, vector<1x8x32xbf16>
      %44 = vector.shape_cast %43 : vector<1x8x32xbf16> to vector<8x32xbf16>
      %45 = arith.extf %44 : vector<8x32xbf16> to vector<8x32xf32>
      %46 = arith.addf %42, %45 : vector<8x32xf32>
      %cst_35 = arith.constant dense<0.000000e+00> : vector<8xf32>
      %47 = vector.multi_reduction <add>, %46, %cst_35 [1] : vector<8x32xf32> to vector<8xf32>
      %48 = vector.shape_cast %47 : vector<8xf32> to vector<8x1xf32>
      %cst_36 = arith.constant 3.200000e+01 : f32
      %49 = vector.broadcast %cst_36 : f32 to vector<8x1xf32>
      %50 = arith.divf %48, %49 : vector<8x1xf32>
      %51 = vector.broadcast %50 : vector<8x1xf32> to vector<8x32xf32>
      %52 = arith.subf %46, %51 : vector<8x32xf32>
      %53 = arith.mulf %52, %52 : vector<8x32xf32>
      %cst_37 = arith.constant dense<0.000000e+00> : vector<8xf32>
      %54 = vector.multi_reduction <add>, %53, %cst_37 [1] : vector<8x32xf32> to vector<8xf32>
      %55 = vector.shape_cast %54 : vector<8xf32> to vector<8x1xf32>
      %cst_38 = arith.constant 3.200000e+01 : f32
      %56 = vector.broadcast %cst_38 : f32 to vector<8x1xf32>
      %57 = arith.divf %55, %56 : vector<8x1xf32>
      %58 = vector.broadcast %50 : vector<8x1xf32> to vector<8x32xf32>
      %59 = arith.subf %46, %58 : vector<8x32xf32>
      %cst_39 = arith.constant 9.99999974E-6 : f32
      %60 = vector.broadcast %cst_39 : f32 to vector<8x1xf32>
      %61 = arith.addf %57, %60 : vector<8x1xf32>
      %62 = math.rsqrt %61 : vector<8x1xf32>
      %63 = vector.broadcast %62 : vector<8x1xf32> to vector<8x32xf32>
      %64 = arith.mulf %59, %63 : vector<8x32xf32>
      %c0_40 = arith.constant 0 : index
      %c0_41 = arith.constant 0 : index
      %65 = vector.load %arg7[%c0_40, %c0_41] : memref<1x32xf32, #tpu.memory_space<vmem>>, vector<1x32xf32>
      %66 = vector.broadcast %65 : vector<1x32xf32> to vector<8x32xf32>
      %67 = arith.mulf %64, %66 : vector<8x32xf32>
      %c0_42 = arith.constant 0 : index
      %c0_43 = arith.constant 0 : index
      %68 = vector.load %arg8[%c0_42, %c0_43] : memref<1x32xf32, #tpu.memory_space<vmem>>, vector<1x32xf32>
      %69 = vector.broadcast %68 : vector<1x32xf32> to vector<8x32xf32>
      %70 = arith.addf %67, %69 : vector<8x32xf32>
      %71 = arith.truncf %70 : vector<8x32xf32> to vector<8x32xbf16>
      %c0_44 = arith.constant 0 : index
      %c0_45 = arith.constant 0 : index
      %c0_46 = arith.constant 0 : index
      %72 = vector.load %arg9[%c0_44, %c0_45, %c0_46] : memref<1x8x32xbf16, #tpu.memory_space<vmem>>, vector<1x8x32xbf16>
      %73 = vector.shape_cast %72 : vector<1x8x32xbf16> to vector<8x32xbf16>
      %74 = vector.shape_cast %71 : vector<8x32xbf16> to vector<1x8x32xbf16>
      tpu.vector_store %arg9[%c0_44, %c0_45, %c0_46], %74 {strides = array<i32>} : memref<1x8x32xbf16, #tpu.memory_space<vmem>>, vector<1x8x32xbf16>,
    } else {
    }
    return
  }
  func.func @transform_0(%arg0: i32, %arg1: i32) -> (i32, i32, i32, i32, i32) {
    %c0_i32 = arith.constant 0 : i32
    %c0_i32_0 = arith.constant 0 : i32
    %c0_i32_1 = arith.constant 0 : i32
    %c0_i32_2 = arith.constant 0 : i32
    return %arg0, %c0_i32, %arg1, %c0_i32_0, %c0_i32_1 : i32, i32, i32, i32, i32
  }
  func.func @transform_1(%arg0: i32, %arg1: i32) -> (i32, i32, i32) {
    %c0_i32 = arith.constant 0 : i32
    %c0_i32_0 = arith.constant 0 : i32
    %c0_i32_1 = arith.constant 0 : i32
    return %arg0, %c0_i32, %c0_i32_0 : i32, i32, i32
  }
  func.func @transform_2(%arg0: i32, %arg1: i32) -> (i32, i32, i32) {
    %c0_i32 = arith.constant 0 : i32
    %c0_i32_0 = arith.constant 0 : i32
    %c0_i32_1 = arith.constant 0 : i32
    %c0_i32_2 = arith.constant 0 : i32
    return %c0_i32, %c0_i32_0, %c0_i32_1 : i32, i32, i32
  }
  func.func @transform_3(%arg0: i32, %arg1: i32) -> (i32, i32) {
    %c0_i32 = arith.constant 0 : i32
    %c0_i32_0 = arith.constant 0 : i32
    %c0_i32_1 = arith.constant 0 : i32
    return %c0_i32, %c0_i32_0 : i32, i32
  }
  func.func @transform_4(%arg0: i32, %arg1: i32) -> (i32, i32, i32) {
    %c0_i32 = arith.constant 0 : i32
    %c0_i32_0 = arith.constant 0 : i32
    %c0_i32_1 = arith.constant 0 : i32
    return %arg0, %c0_i32, %c0_i32_0 : i32, i32, i32
  }
  func.func @transform_5(%arg0: i32, %arg1: i32) -> (i32, i32) {
    %c0_i32 = arith.constant 0 : i32
    %c0_i32_0 = arith.constant 0 : i32
    %c0_i32_1 = arith.constant 0 : i32
    return %c0_i32, %c0_i32_0 : i32, i32
  }
  func.func @transform_6(%arg0: i32, %arg1: i32) -> (i32, i32) {
    %c0_i32 = arith.constant 0 : i32
    %c0_i32_0 = arith.constant 0 : i32
    %c0_i32_1 = arith.constant 0 : i32
    return %c0_i32, %c0_i32_0 : i32, i32
  }
  func.func @transform_7(%arg0: i32, %arg1: i32) -> (i32, i32, i32) {
    %c0_i32 = arith.constant 0 : i32
    %c0_i32_0 = arith.constant 0 : i32
    %c0_i32_1 = arith.constant 0 : i32
    return %arg0, %c0_i32, %c0_i32_0 : i32, i32, i32
  }
}

module attributes {stable_mosaic.version = 11 : i64} {
  func.func @_matmul_kernel(%arg0: i32, %arg1: i32, %arg2: i32, %arg3: memref<16x32xbf16, #tpu.memory_space<vmem>>, %arg4: memref<32x64xbf16, #tpu.memory_space<vmem>>, %arg5: memref<1x64xf32, #tpu.memory_space<vmem>>, %arg6: memref<16x64xbf16, #tpu.memory_space<vmem>>, %arg7: memref<16x64xf32, #tpu.memory_space<vmem>>) attributes {dimension_semantics = [#tpu.dimension_semantics<parallel>, #tpu.dimension_semantics<parallel>, #tpu.dimension_semantics<arbitrary>], iteration_bounds = array<i64: 1, 1, 1>, scalar_prefetch = 0 : i64, scratch_operands = 1 : i64, tpu.core_type = #tpu.core_type<tc>, window_params = [{transform_indices = @transform_0, window_bounds = array<i64: 16, 32>}, {transform_indices = @transform_1, window_bounds = array<i64: 32, 64>}, {transform_indices = @transform_2, window_bounds = array<i64: 1, 64>}, {transform_indices = @transform_3, window_bounds = array<i64: 16, 64>}]} {
    %c0_i32 = arith.constant 0 : i32
    %0 = arith.cmpi eq, %arg2, %c0_i32 : i32
    %1 = arith.extui %0 : i1 to i32
    %c0_i32_0 = arith.constant 0 : i32
    %2 = arith.cmpi ne, %1, %c0_i32_0 : i32
    scf.if %2 {
      %cst_10 = arith.constant 0.000000e+00 : f32
      %12 = vector.broadcast %cst_10 : f32 to vector<16x64xf32>
      %c0_11 = arith.constant 0 : index
      %c0_12 = arith.constant 0 : index
      %13 = vector.load %arg7[%c0_11, %c0_12] : memref<16x64xf32, #tpu.memory_space<vmem>>, vector<16x64xf32>
      tpu.vector_store %arg7[%c0_11, %c0_12], %12 {strides = array<i32>} : memref<16x64xf32, #tpu.memory_space<vmem>>, vector<16x64xf32>,
    } else {
    }
    %c0 = arith.constant 0 : index
    %c0_1 = arith.constant 0 : index
    %3 = vector.load %arg7[%c0, %c0_1] : memref<16x64xf32, #tpu.memory_space<vmem>>, vector<16x64xf32>
    %c0_2 = arith.constant 0 : index
    %c0_3 = arith.constant 0 : index
    %4 = vector.load %arg3[%c0_2, %c0_3] : memref<16x32xbf16, #tpu.memory_space<vmem>>, vector<16x32xbf16>
    %c0_4 = arith.constant 0 : index
    %c0_5 = arith.constant 0 : index
    %5 = vector.load %arg4[%c0_4, %c0_5] : memref<32x64xbf16, #tpu.memory_space<vmem>>, vector<32x64xbf16>
    %cst = arith.constant dense<0.000000e+00> : vector<16x64xf32>
    %6 = tpu.matmul %4, %5, %cst {dimension_numbers = #tpu.dot_dimension_numbers<[1], [0], [0], [1], [0, 0, 1, 1], [], []>} : vector<16x32xbf16>, vector<32x64xbf16>, vector<16x64xf32> -> vector<16x64xf32>
    %7 = arith.addf %3, %6 : vector<16x64xf32>
    %c0_6 = arith.constant 0 : index
    %c0_7 = arith.constant 0 : index
    %8 = vector.load %arg7[%c0_6, %c0_7] : memref<16x64xf32, #tpu.memory_space<vmem>>, vector<16x64xf32>
    tpu.vector_store %arg7[%c0_6, %c0_7], %7 {strides = array<i32>} : memref<16x64xf32, #tpu.memory_space<vmem>>, vector<16x64xf32>,
    %c0_i32_8 = arith.constant 0 : i32
    %9 = arith.cmpi eq, %arg2, %c0_i32_8 : i32
    %10 = arith.extui %9 : i1 to i32
    %c0_i32_9 = arith.constant 0 : i32
    %11 = arith.cmpi ne, %10, %c0_i32_9 : i32
    scf.if %11 {
      %c0_10 = arith.constant 0 : index
      %c0_11 = arith.constant 0 : index
      %12 = vector.load %arg7[%c0_10, %c0_11] : memref<16x64xf32, #tpu.memory_space<vmem>>, vector<16x64xf32>
      %c0_12 = arith.constant 0 : index
      %c0_13 = arith.constant 0 : index
      %13 = vector.load %arg5[%c0_12, %c0_13] : memref<1x64xf32, #tpu.memory_space<vmem>>, vector<1x64xf32>
      %14 = vector.broadcast %13 : vector<1x64xf32> to vector<16x64xf32>
      %15 = arith.addf %12, %14 : vector<16x64xf32>
      %cst_14 = arith.constant 0.000000e+00 : f32
      %16 = vector.broadcast %cst_14 : f32 to vector<16x64xf32>
      %17 = arith.maximumf %15, %16 : vector<16x64xf32>
      %18 = arith.truncf %17 : vector<16x64xf32> to vector<16x64xbf16>
      %c0_15 = arith.constant 0 : index
      %c0_16 = arith.constant 0 : index
      %19 = vector.load %arg6[%c0_15, %c0_16] : memref<16x64xbf16, #tpu.memory_space<vmem>>, vector<16x64xbf16>
      tpu.vector_store %arg6[%c0_15, %c0_16], %18 {strides = array<i32>} : memref<16x64xbf16, #tpu.memory_space<vmem>>, vector<16x64xbf16>,
    } else {
    }
    return
  }
  func.func @transform_0(%arg0: i32, %arg1: i32, %arg2: i32) -> (i32, i32) {
    %c0_i32 = arith.constant 0 : i32
    return %arg0, %arg2 : i32, i32
  }
  func.func @transform_1(%arg0: i32, %arg1: i32, %arg2: i32) -> (i32, i32) {
    %c0_i32 = arith.constant 0 : i32
    return %arg2, %arg1 : i32, i32
  }
  func.func @transform_2(%arg0: i32, %arg1: i32, %arg2: i32) -> (i32, i32) {
    %c0_i32 = arith.constant 0 : i32
    %c0_i32_0 = arith.constant 0 : i32
    return %c0_i32, %arg1 : i32, i32
  }
  func.func @transform_3(%arg0: i32, %arg1: i32, %arg2: i32) -> (i32, i32) {
    %c0_i32 = arith.constant 0 : i32
    return %arg0, %arg1 : i32, i32
  }
}

module attributes {stable_mosaic.version = 11 : i64} {
  func.func @_matmul_res_ln_kernel(%arg0: i32, %arg1: i32, %arg2: memref<16x64xbf16, #tpu.memory_space<vmem>>, %arg3: memref<64x32xbf16, #tpu.memory_space<vmem>>, %arg4: memref<1x32xf32, #tpu.memory_space<vmem>>, %arg5: memref<16x32xbf16, #tpu.memory_space<vmem>>, %arg6: memref<1x32xf32, #tpu.memory_space<vmem>>, %arg7: memref<1x32xf32, #tpu.memory_space<vmem>>, %arg8: memref<16x32xbf16, #tpu.memory_space<vmem>>, %arg9: memref<16x32xf32, #tpu.memory_space<vmem>>) attributes {dimension_semantics = [#tpu.dimension_semantics<parallel>, #tpu.dimension_semantics<arbitrary>], iteration_bounds = array<i64: 1, 1>, scalar_prefetch = 0 : i64, scratch_operands = 1 : i64, tpu.core_type = #tpu.core_type<tc>, window_params = [{transform_indices = @transform_0, window_bounds = array<i64: 16, 64>}, {transform_indices = @transform_1, window_bounds = array<i64: 64, 32>}, {pipeline_mode = #tpu.pipeline_mode<synchronous>, transform_indices = @transform_2, window_bounds = array<i64: 1, 32>}, {transform_indices = @transform_3, window_bounds = array<i64: 16, 32>}, {pipeline_mode = #tpu.pipeline_mode<synchronous>, transform_indices = @transform_4, window_bounds = array<i64: 1, 32>}, {pipeline_mode = #tpu.pipeline_mode<synchronous>, transform_indices = @transform_5, window_bounds = array<i64: 1, 32>}, {transform_indices = @transform_6, window_bounds = array<i64: 16, 32>}]} {
    %c0_i32 = arith.constant 0 : i32
    %0 = arith.cmpi eq, %arg1, %c0_i32 : i32
    %1 = arith.extui %0 : i1 to i32
    %c0_i32_0 = arith.constant 0 : i32
    %2 = arith.cmpi ne, %1, %c0_i32_0 : i32
    scf.if %2 {
      %cst_10 = arith.constant 0.000000e+00 : f32
      %12 = vector.broadcast %cst_10 : f32 to vector<16x32xf32>
      %c0_11 = arith.constant 0 : index
      %c0_12 = arith.constant 0 : index
      %13 = vector.load %arg9[%c0_11, %c0_12] : memref<16x32xf32, #tpu.memory_space<vmem>>, vector<16x32xf32>
      tpu.vector_store %arg9[%c0_11, %c0_12], %12 {strides = array<i32>} : memref<16x32xf32, #tpu.memory_space<vmem>>, vector<16x32xf32>,
    } else {
    }
    %c0 = arith.constant 0 : index
    %c0_1 = arith.constant 0 : index
    %3 = vector.load %arg9[%c0, %c0_1] : memref<16x32xf32, #tpu.memory_space<vmem>>, vector<16x32xf32>
    %c0_2 = arith.constant 0 : index
    %c0_3 = arith.constant 0 : index
    %4 = vector.load %arg2[%c0_2, %c0_3] : memref<16x64xbf16, #tpu.memory_space<vmem>>, vector<16x64xbf16>
    %c0_4 = arith.constant 0 : index
    %c0_5 = arith.constant 0 : index
    %5 = vector.load %arg3[%c0_4, %c0_5] : memref<64x32xbf16, #tpu.memory_space<vmem>>, vector<64x32xbf16>
    %cst = arith.constant dense<0.000000e+00> : vector<16x32xf32>
    %6 = tpu.matmul %4, %5, %cst {dimension_numbers = #tpu.dot_dimension_numbers<[1], [0], [0], [1], [0, 0, 1, 1], [], []>} : vector<16x64xbf16>, vector<64x32xbf16>, vector<16x32xf32> -> vector<16x32xf32>
    %7 = arith.addf %3, %6 : vector<16x32xf32>
    %c0_6 = arith.constant 0 : index
    %c0_7 = arith.constant 0 : index
    %8 = vector.load %arg9[%c0_6, %c0_7] : memref<16x32xf32, #tpu.memory_space<vmem>>, vector<16x32xf32>
    tpu.vector_store %arg9[%c0_6, %c0_7], %7 {strides = array<i32>} : memref<16x32xf32, #tpu.memory_space<vmem>>, vector<16x32xf32>,
    %c0_i32_8 = arith.constant 0 : i32
    %9 = arith.cmpi eq, %arg1, %c0_i32_8 : i32
    %10 = arith.extui %9 : i1 to i32
    %c0_i32_9 = arith.constant 0 : i32
    %11 = arith.cmpi ne, %10, %c0_i32_9 : i32
    scf.if %11 {
      %c0_10 = arith.constant 0 : index
      %c0_11 = arith.constant 0 : index
      %12 = vector.load %arg9[%c0_10, %c0_11] : memref<16x32xf32, #tpu.memory_space<vmem>>, vector<16x32xf32>
      %c0_12 = arith.constant 0 : index
      %c0_13 = arith.constant 0 : index
      %13 = vector.load %arg4[%c0_12, %c0_13] : memref<1x32xf32, #tpu.memory_space<vmem>>, vector<1x32xf32>
      %14 = vector.broadcast %13 : vector<1x32xf32> to vector<16x32xf32>
      %15 = arith.addf %12, %14 : vector<16x32xf32>
      %c0_14 = arith.constant 0 : index
      %c0_15 = arith.constant 0 : index
      %16 = vector.load %arg5[%c0_14, %c0_15] : memref<16x32xbf16, #tpu.memory_space<vmem>>, vector<16x32xbf16>
      %17 = arith.extf %16 : vector<16x32xbf16> to vector<16x32xf32>
      %18 = arith.addf %15, %17 : vector<16x32xf32>
      %cst_16 = arith.constant dense<0.000000e+00> : vector<16xf32>
      %19 = vector.multi_reduction <add>, %18, %cst_16 [1] : vector<16x32xf32> to vector<16xf32>
      %20 = vector.shape_cast %19 : vector<16xf32> to vector<16x1xf32>
      %cst_17 = arith.constant 3.200000e+01 : f32
      %21 = vector.broadcast %cst_17 : f32 to vector<16x1xf32>
      %22 = arith.divf %20, %21 : vector<16x1xf32>
      %23 = vector.broadcast %22 : vector<16x1xf32> to vector<16x32xf32>
      %24 = arith.subf %18, %23 : vector<16x32xf32>
      %25 = arith.mulf %24, %24 : vector<16x32xf32>
      %cst_18 = arith.constant dense<0.000000e+00> : vector<16xf32>
      %26 = vector.multi_reduction <add>, %25, %cst_18 [1] : vector<16x32xf32> to vector<16xf32>
      %27 = vector.shape_cast %26 : vector<16xf32> to vector<16x1xf32>
      %cst_19 = arith.constant 3.200000e+01 : f32
      %28 = vector.broadcast %cst_19 : f32 to vector<16x1xf32>
      %29 = arith.divf %27, %28 : vector<16x1xf32>
      %30 = vector.broadcast %22 : vector<16x1xf32> to vector<16x32xf32>
      %31 = arith.subf %18, %30 : vector<16x32xf32>
      %cst_20 = arith.constant 9.99999974E-6 : f32
      %32 = vector.broadcast %cst_20 : f32 to vector<16x1xf32>
      %33 = arith.addf %29, %32 : vector<16x1xf32>
      %34 = math.rsqrt %33 : vector<16x1xf32>
      %35 = vector.broadcast %34 : vector<16x1xf32> to vector<16x32xf32>
      %36 = arith.mulf %31, %35 : vector<16x32xf32>
      %c0_21 = arith.constant 0 : index
      %c0_22 = arith.constant 0 : index
      %37 = vector.load %arg6[%c0_21, %c0_22] : memref<1x32xf32, #tpu.memory_space<vmem>>, vector<1x32xf32>
      %38 = vector.broadcast %37 : vector<1x32xf32> to vector<16x32xf32>
      %39 = arith.mulf %36, %38 : vector<16x32xf32>
      %c0_23 = arith.constant 0 : index
      %c0_24 = arith.constant 0 : index
      %40 = vector.load %arg7[%c0_23, %c0_24] : memref<1x32xf32, #tpu.memory_space<vmem>>, vector<1x32xf32>
      %41 = vector.broadcast %40 : vector<1x32xf32> to vector<16x32xf32>
      %42 = arith.addf %39, %41 : vector<16x32xf32>
      %43 = arith.truncf %42 : vector<16x32xf32> to vector<16x32xbf16>
      %c0_25 = arith.constant 0 : index
      %c0_26 = arith.constant 0 : index
      %44 = vector.load %arg8[%c0_25, %c0_26] : memref<16x32xbf16, #tpu.memory_space<vmem>>, vector<16x32xbf16>
      tpu.vector_store %arg8[%c0_25, %c0_26], %43 {strides = array<i32>} : memref<16x32xbf16, #tpu.memory_space<vmem>>, vector<16x32xbf16>,
    } else {
    }
    return
  }
  func.func @transform_0(%arg0: i32, %arg1: i32) -> (i32, i32) {
    %c0_i32 = arith.constant 0 : i32
    return %arg0, %arg1 : i32, i32
  }
  func.func @transform_1(%arg0: i32, %arg1: i32) -> (i32, i32) {
    %c0_i32 = arith.constant 0 : i32
    %c0_i32_0 = arith.constant 0 : i32
    return %arg1, %c0_i32 : i32, i32
  }
  func.func @transform_2(%arg0: i32, %arg1: i32) -> (i32, i32) {
    %c0_i32 = arith.constant 0 : i32
    %c0_i32_0 = arith.constant 0 : i32
    %c0_i32_1 = arith.constant 0 : i32
    return %c0_i32, %c0_i32_0 : i32, i32
  }
  func.func @transform_3(%arg0: i32, %arg1: i32) -> (i32, i32) {
    %c0_i32 = arith.constant 0 : i32
    %c0_i32_0 = arith.constant 0 : i32
    return %arg0, %c0_i32 : i32, i32
  }
  func.func @transform_4(%arg0: i32, %arg1: i32) -> (i32, i32) {
    %c0_i32 = arith.constant 0 : i32
    %c0_i32_0 = arith.constant 0 : i32
    %c0_i32_1 = arith.constant 0 : i32
    return %c0_i32, %c0_i32_0 : i32, i32
  }
  func.func @transform_5(%arg0: i32, %arg1: i32) -> (i32, i32) {
    %c0_i32 = arith.constant 0 : i32
    %c0_i32_0 = arith.constant 0 : i32
    %c0_i32_1 = arith.constant 0 : i32
    return %c0_i32, %c0_i32_0 : i32, i32
  }
  func.func @transform_6(%arg0: i32, %arg1: i32) -> (i32, i32) {
    %c0_i32 = arith.constant 0 : i32
    %c0_i32_0 = arith.constant 0 : i32
    return %arg0, %c0_i32 : i32, i32
  }
}

module attributes {stable_mosaic.version = 11 : i64} {
  func.func @_matmul_kernel(%arg0: i32, %arg1: i32, %arg2: i32, %arg3: memref<8x32xbf16, #tpu.memory_space<vmem>>, %arg4: memref<32x32xbf16, #tpu.memory_space<vmem>>, %arg5: memref<1x32xf32, #tpu.memory_space<vmem>>, %arg6: memref<8x32xbf16, #tpu.memory_space<vmem>>, %arg7: memref<8x32xf32, #tpu.memory_space<vmem>>) attributes {dimension_semantics = [#tpu.dimension_semantics<parallel>, #tpu.dimension_semantics<parallel>, #tpu.dimension_semantics<arbitrary>], iteration_bounds = array<i64: 1, 1, 1>, scalar_prefetch = 0 : i64, scratch_operands = 1 : i64, tpu.core_type = #tpu.core_type<tc>, window_params = [{transform_indices = @transform_0, window_bounds = array<i64: 8, 32>}, {transform_indices = @transform_1, window_bounds = array<i64: 32, 32>}, {transform_indices = @transform_2, window_bounds = array<i64: 1, 32>}, {transform_indices = @transform_3, window_bounds = array<i64: 8, 32>}]} {
    %c0_i32 = arith.constant 0 : i32
    %0 = arith.cmpi eq, %arg2, %c0_i32 : i32
    %1 = arith.extui %0 : i1 to i32
    %c0_i32_0 = arith.constant 0 : i32
    %2 = arith.cmpi ne, %1, %c0_i32_0 : i32
    scf.if %2 {
      %cst_10 = arith.constant 0.000000e+00 : f32
      %12 = vector.broadcast %cst_10 : f32 to vector<8x32xf32>
      %c0_11 = arith.constant 0 : index
      %c0_12 = arith.constant 0 : index
      %13 = vector.load %arg7[%c0_11, %c0_12] : memref<8x32xf32, #tpu.memory_space<vmem>>, vector<8x32xf32>
      tpu.vector_store %arg7[%c0_11, %c0_12], %12 {strides = array<i32>} : memref<8x32xf32, #tpu.memory_space<vmem>>, vector<8x32xf32>,
    } else {
    }
    %c0 = arith.constant 0 : index
    %c0_1 = arith.constant 0 : index
    %3 = vector.load %arg7[%c0, %c0_1] : memref<8x32xf32, #tpu.memory_space<vmem>>, vector<8x32xf32>
    %c0_2 = arith.constant 0 : index
    %c0_3 = arith.constant 0 : index
    %4 = vector.load %arg3[%c0_2, %c0_3] : memref<8x32xbf16, #tpu.memory_space<vmem>>, vector<8x32xbf16>
    %c0_4 = arith.constant 0 : index
    %c0_5 = arith.constant 0 : index
    %5 = vector.load %arg4[%c0_4, %c0_5] : memref<32x32xbf16, #tpu.memory_space<vmem>>, vector<32x32xbf16>
    %cst = arith.constant dense<0.000000e+00> : vector<8x32xf32>
    %6 = tpu.matmul %4, %5, %cst {dimension_numbers = #tpu.dot_dimension_numbers<[1], [0], [0], [1], [0, 0, 1, 1], [], []>} : vector<8x32xbf16>, vector<32x32xbf16>, vector<8x32xf32> -> vector<8x32xf32>
    %7 = arith.addf %3, %6 : vector<8x32xf32>
    %c0_6 = arith.constant 0 : index
    %c0_7 = arith.constant 0 : index
    %8 = vector.load %arg7[%c0_6, %c0_7] : memref<8x32xf32, #tpu.memory_space<vmem>>, vector<8x32xf32>
    tpu.vector_store %arg7[%c0_6, %c0_7], %7 {strides = array<i32>} : memref<8x32xf32, #tpu.memory_space<vmem>>, vector<8x32xf32>,
    %c0_i32_8 = arith.constant 0 : i32
    %9 = arith.cmpi eq, %arg2, %c0_i32_8 : i32
    %10 = arith.extui %9 : i1 to i32
    %c0_i32_9 = arith.constant 0 : i32
    %11 = arith.cmpi ne, %10, %c0_i32_9 : i32
    scf.if %11 {
      %c0_10 = arith.constant 0 : index
      %c0_11 = arith.constant 0 : index
      %12 = vector.load %arg7[%c0_10, %c0_11] : memref<8x32xf32, #tpu.memory_space<vmem>>, vector<8x32xf32>
      %c0_12 = arith.constant 0 : index
      %c0_13 = arith.constant 0 : index
      %13 = vector.load %arg5[%c0_12, %c0_13] : memref<1x32xf32, #tpu.memory_space<vmem>>, vector<1x32xf32>
      %14 = vector.broadcast %13 : vector<1x32xf32> to vector<8x32xf32>
      %15 = arith.addf %12, %14 : vector<8x32xf32>
      %cst_14 = arith.constant 5.000000e-01 : f32
      %16 = vector.broadcast %cst_14 : f32 to vector<8x32xf32>
      %17 = arith.mulf %16, %15 : vector<8x32xf32>
      %cst_15 = arith.constant 4.471500e-02 : f32
      %18 = vector.broadcast %cst_15 : f32 to vector<8x32xf32>
      %19 = arith.mulf %18, %15 : vector<8x32xf32>
      %20 = arith.mulf %19, %15 : vector<8x32xf32>
      %21 = arith.mulf %20, %15 : vector<8x32xf32>
      %22 = arith.addf %15, %21 : vector<8x32xf32>
      %cst_16 = arith.constant 0.797884583 : f32
      %23 = vector.broadcast %cst_16 : f32 to vector<8x32xf32>
      %24 = arith.mulf %23, %22 : vector<8x32xf32>
      %25 = math.tanh %24 : vector<8x32xf32>
      %cst_17 = arith.constant 1.000000e+00 : f32
      %26 = vector.broadcast %cst_17 : f32 to vector<8x32xf32>
      %27 = arith.addf %26, %25 : vector<8x32xf32>
      %28 = arith.mulf %17, %27 : vector<8x32xf32>
      %29 = arith.truncf %28 : vector<8x32xf32> to vector<8x32xbf16>
      %c0_18 = arith.constant 0 : index
      %c0_19 = arith.constant 0 : index
      %30 = vector.load %arg6[%c0_18, %c0_19] : memref<8x32xbf16, #tpu.memory_space<vmem>>, vector<8x32xbf16>
      tpu.vector_store %arg6[%c0_18, %c0_19], %29 {strides = array<i32>} : memref<8x32xbf16, #tpu.memory_space<vmem>>, vector<8x32xbf16>,
    } else {
    }
    return
  }
  func.func @transform_0(%arg0: i32, %arg1: i32, %arg2: i32) -> (i32, i32) {
    %c0_i32 = arith.constant 0 : i32
    return %arg0, %arg2 : i32, i32
  }
  func.func @transform_1(%arg0: i32, %arg1: i32, %arg2: i32) -> (i32, i32) {
    %c0_i32 = arith.constant 0 : i32
    return %arg2, %arg1 : i32, i32
  }
  func.func @transform_2(%arg0: i32, %arg1: i32, %arg2: i32) -> (i32, i32) {
    %c0_i32 = arith.constant 0 : i32
    %c0_i32_0 = arith.constant 0 : i32
    return %c0_i32, %arg1 : i32, i32
  }
  func.func @transform_3(%arg0: i32, %arg1: i32, %arg2: i32) -> (i32, i32) {
    %c0_i32 = arith.constant 0 : i32
    return %arg0, %arg1 : i32, i32
  }
}

module attributes {stable_mosaic.version = 11 : i64} {
  func.func @_matmul_nt_kernel(%arg0: i32, %arg1: i32, %arg2: i32, %arg3: memref<8x32xbf16, #tpu.memory_space<vmem>>, %arg4: memref<64x32xbf16, #tpu.memory_space<vmem>>, %arg5: memref<1x64xf32, #tpu.memory_space<vmem>>, %arg6: memref<8x64xf32, #tpu.memory_space<vmem>>, %arg7: memref<8x64xf32, #tpu.memory_space<vmem>>) attributes {dimension_semantics = [#tpu.dimension_semantics<parallel>, #tpu.dimension_semantics<parallel>, #tpu.dimension_semantics<arbitrary>], iteration_bounds = array<i64: 1, 1, 1>, scalar_prefetch = 0 : i64, scratch_operands = 1 : i64, tpu.core_type = #tpu.core_type<tc>, window_params = [{transform_indices = @transform_0, window_bounds = array<i64: 8, 32>}, {transform_indices = @transform_1, window_bounds = array<i64: 64, 32>}, {transform_indices = @transform_2, window_bounds = array<i64: 1, 64>}, {transform_indices = @transform_3, window_bounds = array<i64: 8, 64>}]} {
    %c0_i32 = arith.constant 0 : i32
    %0 = arith.cmpi eq, %arg2, %c0_i32 : i32
    %1 = arith.extui %0 : i1 to i32
    %c0_i32_0 = arith.constant 0 : i32
    %2 = arith.cmpi ne, %1, %c0_i32_0 : i32
    scf.if %2 {
      %cst_10 = arith.constant 0.000000e+00 : f32
      %12 = vector.broadcast %cst_10 : f32 to vector<8x64xf32>
      %c0_11 = arith.constant 0 : index
      %c0_12 = arith.constant 0 : index
      %13 = vector.load %arg7[%c0_11, %c0_12] : memref<8x64xf32, #tpu.memory_space<vmem>>, vector<8x64xf32>
      tpu.vector_store %arg7[%c0_11, %c0_12], %12 {strides = array<i32>} : memref<8x64xf32, #tpu.memory_space<vmem>>, vector<8x64xf32>,
    } else {
    }
    %c0 = arith.constant 0 : index
    %c0_1 = arith.constant 0 : index
    %3 = vector.load %arg7[%c0, %c0_1] : memref<8x64xf32, #tpu.memory_space<vmem>>, vector<8x64xf32>
    %c0_2 = arith.constant 0 : index
    %c0_3 = arith.constant 0 : index
    %4 = vector.load %arg3[%c0_2, %c0_3] : memref<8x32xbf16, #tpu.memory_space<vmem>>, vector<8x32xbf16>
    %c0_4 = arith.constant 0 : index
    %c0_5 = arith.constant 0 : index
    %5 = vector.load %arg4[%c0_4, %c0_5] : memref<64x32xbf16, #tpu.memory_space<vmem>>, vector<64x32xbf16>
    %cst = arith.constant dense<0.000000e+00> : vector<8x64xf32>
    %6 = tpu.matmul %4, %5, %cst {dimension_numbers = #tpu.dot_dimension_numbers<[1], [1], [0], [0], [0, 0, 1, 0], [], []>} : vector<8x32xbf16>, vector<64x32xbf16>, vector<8x64xf32> -> vector<8x64xf32>
    %7 = arith.addf %3, %6 : vector<8x64xf32>
    %c0_6 = arith.constant 0 : index
    %c0_7 = arith.constant 0 : index
    %8 = vector.load %arg7[%c0_6, %c0_7] : memref<8x64xf32, #tpu.memory_space<vmem>>, vector<8x64xf32>
    tpu.vector_store %arg7[%c0_6, %c0_7], %7 {strides = array<i32>} : memref<8x64xf32, #tpu.memory_space<vmem>>, vector<8x64xf32>,
    %c0_i32_8 = arith.constant 0 : i32
    %9 = arith.cmpi eq, %arg2, %c0_i32_8 : i32
    %10 = arith.extui %9 : i1 to i32
    %c0_i32_9 = arith.constant 0 : i32
    %11 = arith.cmpi ne, %10, %c0_i32_9 : i32
    scf.if %11 {
      %c0_10 = arith.constant 0 : index
      %c0_11 = arith.constant 0 : index
      %12 = vector.load %arg7[%c0_10, %c0_11] : memref<8x64xf32, #tpu.memory_space<vmem>>, vector<8x64xf32>
      %c0_12 = arith.constant 0 : index
      %c0_13 = arith.constant 0 : index
      %13 = vector.load %arg5[%c0_12, %c0_13] : memref<1x64xf32, #tpu.memory_space<vmem>>, vector<1x64xf32>
      %14 = vector.broadcast %13 : vector<1x64xf32> to vector<8x64xf32>
      %15 = arith.addf %12, %14 : vector<8x64xf32>
      %c0_14 = arith.constant 0 : index
      %c0_15 = arith.constant 0 : index
      %16 = vector.load %arg6[%c0_14, %c0_15] : memref<8x64xf32, #tpu.memory_space<vmem>>, vector<8x64xf32>
      tpu.vector_store %arg6[%c0_14, %c0_15], %15 {strides = array<i32>} : memref<8x64xf32, #tpu.memory_space<vmem>>, vector<8x64xf32>,
    } else {
    }
    return
  }
  func.func @transform_0(%arg0: i32, %arg1: i32, %arg2: i32) -> (i32, i32) {
    %c0_i32 = arith.constant 0 : i32
    return %arg0, %arg2 : i32, i32
  }
  func.func @transform_1(%arg0: i32, %arg1: i32, %arg2: i32) -> (i32, i32) {
    %c0_i32 = arith.constant 0 : i32
    return %arg1, %arg2 : i32, i32
  }
  func.func @transform_2(%arg0: i32, %arg1: i32, %arg2: i32) -> (i32, i32) {
    %c0_i32 = arith.constant 0 : i32
    %c0_i32_0 = arith.constant 0 : i32
    return %c0_i32, %arg1 : i32, i32
  }
  func.func @transform_3(%arg0: i32, %arg1: i32, %arg2: i32) -> (i32, i32) {
    %c0_i32 = arith.constant 0 : i32
    return %arg0, %arg1 : i32, i32
  }
}

module attributes {stable_mosaic.version = 11 : i64} {
  func.func @_ln_kernel(%arg0: i32, %arg1: memref<8x32xbf16, #tpu.memory_space<vmem>>, %arg2: memref<1x32xf32, #tpu.memory_space<vmem>>, %arg3: memref<1x32xf32, #tpu.memory_space<vmem>>, %arg4: memref<8x32xbf16, #tpu.memory_space<vmem>>) attributes {dimension_semantics = [#tpu.dimension_semantics<parallel>], iteration_bounds = array<i64: 1>, scalar_prefetch = 0 : i64, scratch_operands = 0 : i64, tpu.core_type = #tpu.core_type<tc>, window_params = [{transform_indices = @transform_0, window_bounds = array<i64: 8, 32>}, {pipeline_mode = #tpu.pipeline_mode<synchronous>, transform_indices = @transform_1, window_bounds = array<i64: 1, 32>}, {pipeline_mode = #tpu.pipeline_mode<synchronous>, transform_indices = @transform_2, window_bounds = array<i64: 1, 32>}, {transform_indices = @transform_3, window_bounds = array<i64: 8, 32>}]} {
    %c0 = arith.constant 0 : index
    %c0_0 = arith.constant 0 : index
    %0 = vector.load %arg1[%c0, %c0_0] : memref<8x32xbf16, #tpu.memory_space<vmem>>, vector<8x32xbf16>
    %1 = arith.extf %0 : vector<8x32xbf16> to vector<8x32xf32>
    %cst = arith.constant dense<0.000000e+00> : vector<8xf32>
    %2 = vector.multi_reduction <add>, %1, %cst [1] : vector<8x32xf32> to vector<8xf32>
    %3 = vector.shape_cast %2 : vector<8xf32> to vector<8x1xf32>
    %cst_1 = arith.constant 3.200000e+01 : f32
    %4 = vector.broadcast %cst_1 : f32 to vector<8x1xf32>
    %5 = arith.divf %3, %4 : vector<8x1xf32>
    %6 = vector.broadcast %5 : vector<8x1xf32> to vector<8x32xf32>
    %7 = arith.subf %1, %6 : vector<8x32xf32>
    %8 = arith.mulf %7, %7 : vector<8x32xf32>
    %cst_2 = arith.constant dense<0.000000e+00> : vector<8xf32>
    %9 = vector.multi_reduction <add>, %8, %cst_2 [1] : vector<8x32xf32> to vector<8xf32>
    %10 = vector.shape_cast %9 : vector<8xf32> to vector<8x1xf32>
    %cst_3 = arith.constant 3.200000e+01 : f32
    %11 = vector.broadcast %cst_3 : f32 to vector<8x1xf32>
    %12 = arith.divf %10, %11 : vector<8x1xf32>
    %13 = vector.broadcast %5 : vector<8x1xf32> to vector<8x32xf32>
    %14 = arith.subf %1, %13 : vector<8x32xf32>
    %cst_4 = arith.constant 9.99999974E-6 : f32
    %15 = vector.broadcast %cst_4 : f32 to vector<8x1xf32>
    %16 = arith.addf %12, %15 : vector<8x1xf32>
    %17 = math.rsqrt %16 : vector<8x1xf32>
    %18 = vector.broadcast %17 : vector<8x1xf32> to vector<8x32xf32>
    %19 = arith.mulf %14, %18 : vector<8x32xf32>
    %c0_5 = arith.constant 0 : index
    %c0_6 = arith.constant 0 : index
    %20 = vector.load %arg2[%c0_5, %c0_6] : memref<1x32xf32, #tpu.memory_space<vmem>>, vector<1x32xf32>
    %21 = vector.broadcast %20 : vector<1x32xf32> to vector<8x32xf32>
    %22 = arith.mulf %19, %21 : vector<8x32xf32>
    %c0_7 = arith.constant 0 : index
    %c0_8 = arith.constant 0 : index
    %23 = vector.load %arg3[%c0_7, %c0_8] : memref<1x32xf32, #tpu.memory_space<vmem>>, vector<1x32xf32>
    %24 = vector.broadcast %23 : vector<1x32xf32> to vector<8x32xf32>
    %25 = arith.addf %22, %24 : vector<8x32xf32>
    %26 = arith.truncf %25 : vector<8x32xf32> to vector<8x32xbf16>
    %c0_9 = arith.constant 0 : index
    %c0_10 = arith.constant 0 : index
    %27 = vector.load %arg4[%c0_9, %c0_10] : memref<8x32xbf16, #tpu.memory_space<vmem>>, vector<8x32xbf16>
    tpu.vector_store %arg4[%c0_9, %c0_10], %26 {strides = array<i32>} : memref<8x32xbf16, #tpu.memory_space<vmem>>, vector<8x32xbf16>,
    return
  }
  func.func @transform_0(%arg0: i32) -> (i32, i32) {
    %c0_i32 = arith.constant 0 : i32
    %c0_i32_0 = arith.constant 0 : i32
    return %arg0, %c0_i32 : i32, i32
  }
  func.func @transform_1(%arg0: i32) -> (i32, i32) {
    %c0_i32 = arith.constant 0 : i32
    %c0_i32_0 = arith.constant 0 : i32
    %c0_i32_1 = arith.constant 0 : i32
    return %c0_i32, %c0_i32_0 : i32, i32
  }
  func.func @transform_2(%arg0: i32) -> (i32, i32) {
    %c0_i32 = arith.constant 0 : i32
    %c0_i32_0 = arith.constant 0 : i32
    %c0_i32_1 = arith.constant 0 : i32
    return %c0_i32, %c0_i32_0 : i32, i32
  }
  func.func @transform_3(%arg0: i32) -> (i32, i32) {
    %c0_i32 = arith.constant 0 : i32
    %c0_i32_0 = arith.constant 0 : i32
    return %arg0, %c0_i32 : i32, i32
  }
}

</mosaic_0001>

<llo_original>
// kernel: bert_forward.11
$region0: #{bert_forward.11}
  #allocation0 [shape = 'u32[]', space=smem, size = 0x4, offset = 0x4, fixed_abs, tag = 'smem constant byte address 0x4 - core index']
  #allocation1 [shape = 'u32[144,128]{1,0:T(1,128)}', space=vmem, size = 0x12000, scoped, tag = 'internal scratch']
  #allocation2 [shape = 'f32[16,96]{1,0:T(8,128)}', space=vmem, size = 0x2000, scoped, tag = 'scratch operand']
  %s0 = inlined_call_operand.vmem [shape: bf16[16,32], index: 0, kind: input, shape index: {}]
  %s1 = inlined_call_operand.vmem [shape: bf16[32,96], index: 1, kind: input, shape index: {}]
  %s2 = inlined_call_operand.vmem [shape: f32[1,96], index: 2, kind: input, shape index: {}]
  %s3 = inlined_call_operand.vmem [shape: bf16[16,96], index: 3, kind: output, shape index: {}]
  %s4 = sld [smem:[#allocation0]]
  $region30: #{bert_forward.11} parent=0
    _
  %s6 = ssub.s32 1, %s4
  %s7 = scalar_select 0, %s6, %s4
  // Predicated region
  $region2: #{bert_forward.11} parent=0 // pred_check
    _
  $region3: #{bert_forward.11} parent=0 // pred_check_branch
    %9 = sbr.rel (0) target = $region5
  $region4: #{bert_forward.11} parent=0 // pred_region
    _
  $region5: #{bert_forward.11} parent=0 // pred_fallthru
    _
  // Predicated region
  $region6: #{bert_forward.11} parent=0 // pred_check
    _
  $region7: #{bert_forward.11} parent=0 // pred_check_branch
    %11 = sbr.rel (0) target = $region9
  $region8: #{bert_forward.11} parent=0 // pred_region
    _
  $region9: #{bert_forward.11} parent=0 // pred_fallthru
    _
  // Predicated region
  $region10: #{bert_forward.11} parent=0 // pred_check
    _
  $region11: #{bert_forward.11} parent=0 // pred_check_branch
    %13 = sbr.rel (0) target = $region13
  $region12: #{bert_forward.11} parent=0 // pred_region
    _
  $region13: #{bert_forward.11} parent=0 // pred_fallthru
    _
  %p15 = scmp.eq.s32.totalorder 0, 0
  // Predicated region
  $region14: #{bert_forward.11} parent=0 // pred_check
    %p16 = pneg %p15
  $region15: #{bert_forward.11} parent=0 // pred_check_branch
    %18 = sbr.rel (%p16) target = $region17
  $region16: #{bert_forward.11} parent=0 // pred_region
    %vm19 = vcmask 785408
    %20 = vst.msk [vmem:[#allocation2] sm:$0xff] %vm19, 0.0
    %21 = vst.msk [vmem:[#allocation2 + $0x8] sm:$0xff] %vm19, 0.0
  $region17: #{bert_forward.11} parent=0 // pred_fallthru
    _
  %v22 = vld [vmem:[#allocation2] sm:$0xff]
  %v23 = vld [vmem:[#allocation2 + $0x8] sm:$0xff]
  %v24 = vld [vmem:[%s0] sm:$0xf]
  %v25 = vld [vmem:[%s0 + $0x4] sm:$0xf]
  %v26 = vld [vmem:[%s1] sm:$0xf]
  %v27 = vld [vmem:[%s1 + $0x4] sm:$0xf]
  %v28 = vld [vmem:[%s1 + $0x8] sm:$0xf]
  %v29 = vld [vmem:[%s1 + $0xc] sm:$0xf]
  %v32 = vunpack.c.l.b16 %v24
  %v33 = vunpack.c.l.b16 %v25
  %v34 = vpack.c.b16 %v33, %v32
  %v39 = vunpack.c.l.b16 %v26
  %v40 = vunpack.c.l.b16 %v27
  %v41 = vunpack.c.l.b16 %v28
  %v42 = vunpack.c.l.b16 %v29
  %v43 = vpack.c.b16 %v40, %v39
  %v44 = vpack.c.b16 %v42, %v41
  %vm47 = vcmask 261120
  %v49 = vsel %vm47, %v34, 0
  %51 = vmatprep.subr.bf16.mxu0 0
  %52 = vmatpush1.bf16.msra.mxu0 %v43
  %53 = vmatprep.subr.bf16.mxu0 0
  %54 = vmatpush1.bf16.msra.mxu0 %v44
  %55 = vmatprep.subr.bf16.mxu0 0
  %56 = vmatpush1.bf16.msra.mxu0 0
  %57 = vmatprep.subr.bf16.mxu0 0
  %58 = vmatpush1.bf16.msra.mxu0 0
  %59 = vmatprep.subr.bf16.mxu0 0
  %60 = vmatpush1.bf16.msra.mxu0 0
  %61 = vmatprep.subr.bf16.mxu0 0
  %62 = vmatpush1.bf16.msra.mxu0 0
  %63 = vmatprep.subr.bf16.mxu0 0
  %64 = vmatpush1.bf16.msra.mxu0 0
  %65 = vmatprep.subr.bf16.mxu0 0
  %66 = vmatpush1.bf16.msra.mxu0 0
  %67 = vmatprep.subr.bf16.mxu0 0
  %68 = vmatpush1.bf16.msra.mxu0 0
  %69 = vmatprep.subr.bf16.mxu0 0
  %70 = vmatpush1.bf16.msra.mxu0 0
  %71 = vmatprep.subr.bf16.mxu0 0
  %72 = vmatpush1.bf16.msra.mxu0 0
  %73 = vmatprep.subr.bf16.mxu0 0
  %74 = vmatpush1.bf16.msra.mxu0 0
  %75 = vmatprep.subr.bf16.mxu0 0
  %76 = vmatpush1.bf16.msra.mxu0 0
  %77 = vmatprep.subr.bf16.mxu0 0
  %78 = vmatpush1.bf16.msra.mxu0 0
  %79 = vmatprep.subr.bf16.mxu0 0
  %80 = vmatpush1.bf16.msra.mxu0 0
  %81 = vmatprep.subr.bf16.mxu0 0
  %82 = vmatpush1.bf16.msra.mxu0 0
  %83 = vmatprep.mubr.bf16.mxu0 0
  %84 = vmatmul.mubr.bf16.gmra.mrb[0].mxu0 %v49
  %v85 = vpop.f32.mrb[0].mxu0
  %v86 = vadd.f32 0.0, %v85
  %v87 = vpop.f32.mrb[0].mxu0
  %v88 = vpop.f32.mrb[0].mxu0
  %v89 = vadd.f32 0.0, %v88
  %v90 = vpop.f32.mrb[0].mxu0
  %91 = vdwg.mxu0
  %v92 = vadd.f32 %v22, %v86
  %v93 = vadd.f32 %v23, %v89
  %vm94 = vcmask 785408
  %95 = vst.msk [vmem:[#allocation2] sm:$0xff] %vm94, %v92
  %96 = vst.msk [vmem:[#allocation2 + $0x8] sm:$0xff] %vm94, %v93
  // Predicated region
  $region18: #{bert_forward.11} parent=0 // pred_check
    %p97 = pneg %p15
  $region19: #{bert_forward.11} parent=0 // pred_check_branch
    %99 = sbr.rel (%p97) target = $region21
  $region20: #{bert_forward.11} parent=0 // pred_region
    %v100 = vld [vmem:[#allocation2] sm:$0xff]
    %v101 = vld [vmem:[#allocation2 + $0x8] sm:$0xff]
    %v102 = vld [vmem:[%s2] sm:$0x1]
    %v104 = vlaneseq
    %v105 = vshrl.u32 %v104, 7
    %v106 = vsub.s32 0, %v105
    %v107 = vrot.slane %v102, %v106
    %v109 = vadd.f32 %v100, %v107
    %v110 = vadd.f32 %v101, %v107
    %v111 = vpack.c.bf16 %v110, %v109
    %v113 = vunpack.c.l.b16 %v111
    %v114 = vunpack.c.h.b16 %v111
    %v115 = vpack.c.b16 %v113, %v113
    %v116 = vpack.c.b16 %v114, %v114
    %vm119 = vcmask 781312
    %120 = vst.msk [vmem:[%s3] sm:$0xf] %vm119, %v115
    %121 = vst.msk [vmem:[%s3 + $0x4] sm:$0xf] %vm119, %v116
  $region21: #{bert_forward.11} parent=0 // pred_fallthru
    _
  // Predicated region
  $region22: #{bert_forward.11} parent=0 // pred_check
    _
  $region23: #{bert_forward.11} parent=0 // pred_check_branch
    %123 = sbr.rel (0) target = $region25
  $region24: #{bert_forward.11} parent=0 // pred_region
    _
  $region25: #{bert_forward.11} parent=0 // pred_fallthru
    _
  // Predicated region
  $region26: #{bert_forward.11} parent=0 // pred_check
    _
  $region27: #{bert_forward.11} parent=0 // pred_check_branch
    %125 = sbr.rel (0) target = $region29
  $region28: #{bert_forward.11} parent=0 // pred_region
    _
  $region29: #{bert_forward.11} parent=0 // pred_fallthru
    _

// kernel: bert_forward.13
$region0: #{bert_forward.13}
  #allocation0 [shape = 'u32[]', space=smem, size = 0x4, offset = 0x4, fixed_abs, tag = 'smem constant byte address 0x4 - core index']
  #allocation1 [shape = 'u32[144,128]{1,0:T(1,128)}', space=vmem, size = 0x12000, scoped, tag = 'internal scratch']
  #allocation2 [shape = 'f32[16,64]{1,0:T(8,128)}', space=vmem, size = 0x2000, scoped, tag = 'scratch operand']
  %s0 = inlined_call_operand.vmem [shape: bf16[16,32], index: 0, kind: input, shape index: {}]
  %s1 = inlined_call_operand.vmem [shape: bf16[32,64], index: 1, kind: input, shape index: {}]
  %s2 = inlined_call_operand.vmem [shape: f32[1,64], index: 2, kind: input, shape index: {}]
  %s3 = inlined_call_operand.vmem [shape: bf16[16,64], index: 3, kind: output, shape index: {}]
  %s4 = sld [smem:[#allocation0]]
  $region30: #{bert_forward.13} parent=0
    _
  %s6 = ssub.s32 1, %s4
  %s7 = scalar_select 0, %s6, %s4
  // Predicated region
  $region2: #{bert_forward.13} parent=0 // pred_check
    _
  $region3: #{bert_forward.13} parent=0 // pred_check_branch
    %9 = sbr.rel (0) target = $region5
  $region4: #{bert_forward.13} parent=0 // pred_region
    _
  $region5: #{bert_forward.13} parent=0 // pred_fallthru
    _
  // Predicated region
  $region6: #{bert_forward.13} parent=0 // pred_check
    _
  $region7: #{bert_forward.13} parent=0 // pred_check_branch
    %11 = sbr.rel (0) target = $region9
  $region8: #{bert_forward.13} parent=0 // pred_region
    _
  $region9: #{bert_forward.13} parent=0 // pred_fallthru
    _
  // Predicated region
  $region10: #{bert_forward.13} parent=0 // pred_check
    _
  $region11: #{bert_forward.13} parent=0 // pred_check_branch
    %13 = sbr.rel (0) target = $region13
  $region12: #{bert_forward.13} parent=0 // pred_region
    _
  $region13: #{bert_forward.13} parent=0 // pred_fallthru
    _
  %p15 = scmp.eq.s32.totalorder 0, 0
  // Predicated region
  $region14: #{bert_forward.13} parent=0 // pred_check
    %p16 = pneg %p15
  $region15: #{bert_forward.13} parent=0 // pred_check_branch
    %18 = sbr.rel (%p16) target = $region17
  $region16: #{bert_forward.13} parent=0 // pred_region
    %vm19 = vcmask 523264
    %20 = vst.msk [vmem:[#allocation2] sm:$0xff] %vm19, 0.0
    %21 = vst.msk [vmem:[#allocation2 + $0x8] sm:$0xff] %vm19, 0.0
  $region17: #{bert_forward.13} parent=0 // pred_fallthru
    _
  %v22 = vld [vmem:[#allocation2] sm:$0xff]
  %v23 = vld [vmem:[#allocation2 + $0x8] sm:$0xff]
  %v24 = vld [vmem:[%s0] sm:$0xf]
  %v25 = vld [vmem:[%s0 + $0x4] sm:$0xf]
  %v26 = vld [vmem:[%s1] sm:$0xf]
  %v27 = vld [vmem:[%s1 + $0x4] sm:$0xf]
  %v28 = vld [vmem:[%s1 + $0x8] sm:$0xf]
  %v29 = vld [vmem:[%s1 + $0xc] sm:$0xf]
  %v32 = vunpack.c.l.b16 %v24
  %v33 = vunpack.c.l.b16 %v25
  %v34 = vpack.c.b16 %v33, %v32
  %v39 = vunpack.c.l.b16 %v26
  %v40 = vunpack.c.l.b16 %v27
  %v41 = vunpack.c.l.b16 %v28
  %v42 = vunpack.c.l.b16 %v29
  %v43 = vpack.c.b16 %v40, %v39
  %v44 = vpack.c.b16 %v42, %v41
  %vm47 = vcmask 261120
  %v49 = vsel %vm47, %v34, 0
  %51 = vmatprep.subr.bf16.mxu0 0
  %52 = vmatpush1.bf16.msra.mxu0 %v43
  %53 = vmatprep.subr.bf16.mxu0 0
  %54 = vmatpush1.bf16.msra.mxu0 %v44
  %55 = vmatprep.subr.bf16.mxu0 0
  %56 = vmatpush1.bf16.msra.mxu0 0
  %57 = vmatprep.subr.bf16.mxu0 0
  %58 = vmatpush1.bf16.msra.mxu0 0
  %59 = vmatprep.subr.bf16.mxu0 0
  %60 = vmatpush1.bf16.msra.mxu0 0
  %61 = vmatprep.subr.bf16.mxu0 0
  %62 = vmatpush1.bf16.msra.mxu0 0
  %63 = vmatprep.subr.bf16.mxu0 0
  %64 = vmatpush1.bf16.msra.mxu0 0
  %65 = vmatprep.subr.bf16.mxu0 0
  %66 = vmatpush1.bf16.msra.mxu0 0
  %67 = vmatprep.subr.bf16.mxu0 0
  %68 = vmatpush1.bf16.msra.mxu0 0
  %69 = vmatprep.subr.bf16.mxu0 0
  %70 = vmatpush1.bf16.msra.mxu0 0
  %71 = vmatprep.subr.bf16.mxu0 0
  %72 = vmatpush1.bf16.msra.mxu0 0
  %73 = vmatprep.subr.bf16.mxu0 0
  %74 = vmatpush1.bf16.msra.mxu0 0
  %75 = vmatprep.subr.bf16.mxu0 0
  %76 = vmatpush1.bf16.msra.mxu0 0
  %77 = vmatprep.subr.bf16.mxu0 0
  %78 = vmatpush1.bf16.msra.mxu0 0
  %79 = vmatprep.subr.bf16.mxu0 0
  %80 = vmatpush1.bf16.msra.mxu0 0
  %81 = vmatprep.subr.bf16.mxu0 0
  %82 = vmatpush1.bf16.msra.mxu0 0
  %83 = vmatprep.mubr.bf16.mxu0 0
  %84 = vmatmul.mubr.bf16.gmra.mrb[0].mxu0 %v49
  %v85 = vpop.f32.mrb[0].mxu0
  %v86 = vadd.f32 0.0, %v85
  %v87 = vpop.f32.mrb[0].mxu0
  %v88 = vpop.f32.mrb[0].mxu0
  %v89 = vadd.f32 0.0, %v88
  %v90 = vpop.f32.mrb[0].mxu0
  %91 = vdwg.mxu0
  %v92 = vadd.f32 %v22, %v86
  %v93 = vadd.f32 %v23, %v89
  %vm94 = vcmask 523264
  %95 = vst.msk [vmem:[#allocation2] sm:$0xff] %vm94, %v92
  %96 = vst.msk [vmem:[#allocation2 + $0x8] sm:$0xff] %vm94, %v93
  // Predicated region
  $region18: #{bert_forward.13} parent=0 // pred_check
    %p97 = pneg %p15
  $region19: #{bert_forward.13} parent=0 // pred_check_branch
    %99 = sbr.rel (%p97) target = $region21
  $region20: #{bert_forward.13} parent=0 // pred_region
    %v100 = vld [vmem:[#allocation2] sm:$0xff]
    %v101 = vld [vmem:[#allocation2 + $0x8] sm:$0xff]
    %v102 = vld [vmem:[%s2] sm:$0x1]
    %v104 = vlaneseq
    %v105 = vshrl.u32 %v104, 7
    %v106 = vsub.s32 0, %v105
    %v107 = vrot.slane %v102, %v106
    %v109 = vadd.f32 %v100, %v107
    %v110 = vadd.f32 %v101, %v107
    %v111 = vmax.f32 %v109, 0.0
    %v112 = vmax.f32 %v110, 0.0
    %v113 = vpack.c.bf16 %v112, %v111
    %v115 = vunpack.c.l.b16 %v113
    %v116 = vunpack.c.h.b16 %v113
    %v117 = vpack.c.b16 %v115, %v115
    %v118 = vpack.c.b16 %v116, %v116
    %vm121 = vcmask 519168
    %122 = vst.msk [vmem:[%s3] sm:$0xf] %vm121, %v117
    %123 = vst.msk [vmem:[%s3 + $0x4] sm:$0xf] %vm121, %v118
  $region21: #{bert_forward.13} parent=0 // pred_fallthru
    _
  // Predicated region
  $region22: #{bert_forward.13} parent=0 // pred_check
    _
  $region23: #{bert_forward.13} parent=0 // pred_check_branch
    %125 = sbr.rel (0) target = $region25
  $region24: #{bert_forward.13} parent=0 // pred_region
    _
  $region25: #{bert_forward.13} parent=0 // pred_fallthru
    _
  // Predicated region
  $region26: #{bert_forward.13} parent=0 // pred_check
    _
  $region27: #{bert_forward.13} parent=0 // pred_check_branch
    %127 = sbr.rel (0) target = $region29
  $region28: #{bert_forward.13} parent=0 // pred_region
    _
  $region29: #{bert_forward.13} parent=0 // pred_fallthru
    _

// kernel: bert_forward.12
$region0: #{bert_forward.12}
  #allocation0 [shape = 'u32[]', space=smem, size = 0x4, offset = 0x4, fixed_abs, tag = 'smem constant byte address 0x4 - core index']
  #allocation1 [shape = 'u32[144,128]{1,0:T(1,128)}', space=vmem, size = 0x12000, scoped, tag = 'internal scratch']
  #allocation2 [shape = 'f32[8,32]{1,0:T(8,128)}', space=vmem, size = 0x1000, scoped, tag = 'scratch operand']
  %s0 = inlined_call_operand.vmem [shape: bf16[2,8,4,3,8], index: 0, kind: input, shape index: {}]
  %s1 = inlined_call_operand.vmem [shape: f32[2,1,8], index: 1, kind: input, shape index: {}]
  %s2 = inlined_call_operand.vmem [shape: bf16[4,8,32], index: 2, kind: input, shape index: {}]
  %s3 = inlined_call_operand.vmem [shape: f32[1,32], index: 3, kind: input, shape index: {}]
  %s4 = inlined_call_operand.vmem [shape: bf16[2,8,32], index: 4, kind: input, shape index: {}]
  %s5 = inlined_call_operand.vmem [shape: f32[1,32], index: 5, kind: input, shape index: {}]
  %s6 = inlined_call_operand.vmem [shape: f32[1,32], index: 6, kind: input, shape index: {}]
  %s7 = inlined_call_operand.vmem [shape: bf16[2,8,32], index: 7, kind: output, shape index: {}]
  %s8 = sld [smem:[#allocation0]]
  $region110: #{bert_forward.12} parent=0
    _
  %s10 = ssub.s32 1, %s8
  %s11 = scalar_select 0, %s10, %s8
  $region1: #{bert_forward.12} parent=0
    #allocation3 [shape = 'u8[16384]{0}', space=vmem, size = 0x4000, scoped, tag = 'input window, operand 0']
    loop: start=0, step=1, limit=10
    $region2: #{bert_forward.12} parent=1 // loop_pre_header
      _
    $region3: #{bert_forward.12} parent=1 // loop_header
      %s13 = sphi 0, %s17
      %p14 = scmp.ge.s32.totalorder %s13, 10
      %s20 = sphi 0, %s32
      %s21 = sphi 0, %s28
      %s22 = sphi 0, %s20
      %s23 = sphi 0, %s21
      %s24 = sphi 0, %s22
      %s25 = sphi 0, %s23
      %s37 = sphi 0, %s39
      %s40 = sphi 0, %s37
      %s41 = sphi 0, %s40
      %s57 = sphi 0, %s41
      %s63 = sphi 0, %s65
      %s66 = sphi 0, %s63
      %s67 = sphi 0, %s66
      %s83 = sphi 0, %s67
      %s87 = sphi 0, %s87
      %s89 = sphi 0, %s87
      %s90 = sphi 0, %s89
      %s104 = sphi 0, %s90
      %s108 = sphi 0, %s108
      %s110 = sphi 0, %s108
      %s111 = sphi 0, %s110
      %s125 = sphi 0, %s111
      %s131 = sphi 0, %s133
      %s134 = sphi 0, %s131
      %s135 = sphi 0, %s134
      %s151 = sphi 0, %s135
      %s155 = sphi 0, %s155
      %s157 = sphi 0, %s155
      %s158 = sphi 0, %s157
      %s172 = sphi 0, %s158
      %s176 = sphi 0, %s176
      %s178 = sphi 0, %s176
      %s179 = sphi 0, %s178
      %s193 = sphi 0, %s179
      %s199 = sphi 0, %s201
      %s202 = sphi 0, %s199
      %s203 = sphi 0, %s202
      %s219 = sphi 0, %s203
    $region4: #{bert_forward.12} parent=1 // loop_header_branch
      %16 = sbr.rel (%p14) target = $region8
    $region5: #{bert_forward.12} parent=1 // loop_body
      %s18 = ssub.s32 %s13, 1
      %s19 = ssub.s32 %s13, 2
      %s26 = sadd.s32 1, %s21
      %p27 = scmp.ge.s32.totalorder %s26, 4
      %s28 = scalar_select %p27, 0, %s26
      %s29 = sadd.s32 1, %s20
      %s30 = scalar_select %p27, %s29, %s20
      %p31 = scmp.ge.s32.totalorder %s30, 2
      %s32 = scalar_select %p31, 0, %s30
      %s33 = ssub.s32 %s20, %s32
      %s34 = ssub.s32 %s21, %s28
      %s35 = sor.u32 %s33, %s34
      %p36 = scmp.eq.s32.totalorder %s35, 0
      %s38 = sadd.s32 %s37, 1
      %s39 = scalar_select %p36, %s37, %s38
      %p42 = pneg %p36
      %p43 = scmp.eq.s32.totalorder %s13, 7
      %p44 = por %p42, %p43
      %p45 = scmp.ne.s32.totalorder %s37, %s40
      %p46 = scmp.eq.s32.totalorder %s13, 0
      %p47 = por %p45, %p46
      %p48 = scmp.ne.s32.totalorder %s37, %s40
      %p49 = scmp.eq.s32.totalorder %s18, 7
      %p50 = por %p48, %p49
      %p51 = scmp.ne.s32.totalorder %s40, %s41
      %p52 = scmp.eq.s32.totalorder %s18, 0
      %p53 = por %p51, %p52
      %p54 = scmp.ne.s32.totalorder %s40, %s41
      %p55 = scmp.eq.s32.totalorder %s19, 7
      %p56 = por %p54, %p55
      %p58 = scmp.ne.s32.totalorder %s41, %s57
      %p59 = scmp.eq.s32.totalorder %s19, 0
      %p60 = por %p58, %p59
      %s61 = ssub.s32 %s20, %s32
      %p62 = scmp.eq.s32.totalorder %s61, 0
      %s64 = sadd.s32 %s63, 1
      %s65 = scalar_select %p62, %s63, %s64
      %p68 = pneg %p62
      %p69 = scmp.eq.s32.totalorder %s13, 7
      %p70 = por %p68, %p69
      %p71 = scmp.ne.s32.totalorder %s63, %s66
      %p72 = scmp.eq.s32.totalorder %s13, 0
      %p73 = por %p71, %p72
      %p74 = scmp.ne.s32.totalorder %s63, %s66
      %p75 = scmp.eq.s32.totalorder %s18, 7
      %p76 = por %p74, %p75
      %p77 = scmp.ne.s32.totalorder %s66, %s67
      %p78 = scmp.eq.s32.totalorder %s18, 0
      %p79 = por %p77, %p78
      %p80 = scmp.ne.s32.totalorder %s66, %s67
      %p81 = scmp.eq.s32.totalorder %s19, 7
      %p82 = por %p80, %p81
      %p84 = scmp.ne.s32.totalorder %s67, %s83
      %p85 = scmp.eq.s32.totalorder %s19, 0
      %p86 = por %p84, %p85
      %s88 = sadd.s32 %s87, 1
      %p91 = scmp.eq.s32.totalorder %s13, 7
      %p92 = scmp.ne.s32.totalorder %s87, %s89
      %p93 = scmp.eq.s32.totalorder %s13, 0
      %p94 = por %p92, %p93
      %p95 = scmp.ne.s32.totalorder %s87, %s89
      %p96 = scmp.eq.s32.totalorder %s18, 7
      %p97 = por %p95, %p96
      %p98 = scmp.ne.s32.totalorder %s89, %s90
      %p99 = scmp.eq.s32.totalorder %s18, 0
      %p100 = por %p98, %p99
      %p101 = scmp.ne.s32.totalorder %s89, %s90
      %p102 = scmp.eq.s32.totalorder %s19, 7
      %p103 = por %p101, %p102
      %p105 = scmp.ne.s32.totalorder %s90, %s104
      %p106 = scmp.eq.s32.totalorder %s19, 0
      %p107 = por %p105, %p106
      %s109 = sadd.s32 %s108, 1
      %p112 = scmp.eq.s32.totalorder %s13, 7
      %p113 = scmp.ne.s32.totalorder %s108, %s110
      %p114 = scmp.eq.s32.totalorder %s13, 0
      %p115 = por %p113, %p114
      %p116 = scmp.ne.s32.totalorder %s108, %s110
      %p117 = scmp.eq.s32.totalorder %s18, 7
      %p118 = por %p116, %p117
      %p119 = scmp.ne.s32.totalorder %s110, %s111
      %p120 = scmp.eq.s32.totalorder %s18, 0
      %p121 = por %p119, %p120
      %p122 = scmp.ne.s32.totalorder %s110, %s111
      %p123 = scmp.eq.s32.totalorder %s19, 7
      %p124 = por %p122, %p123
      %p126 = scmp.ne.s32.totalorder %s111, %s125
      %p127 = scmp.eq.s32.totalorder %s19, 0
      %p128 = por %p126, %p127
      %s129 = ssub.s32 %s20, %s32
      %p130 = scmp.eq.s32.totalorder %s129, 0
      %s132 = sadd.s32 %s131, 1
      %s133 = scalar_select %p130, %s131, %s132
      %p136 = pneg %p130
      %p137 = scmp.eq.s32.totalorder %s13, 7
      %p138 = por %p136, %p137
      %p139 = scmp.ne.s32.totalorder %s131, %s134
      %p140 = scmp.eq.s32.totalorder %s13, 0
      %p141 = por %p139, %p140
      %p142 = scmp.ne.s32.totalorder %s131, %s134
      %p143 = scmp.eq.s32.totalorder %s18, 7
      %p144 = por %p142, %p143
      %p145 = scmp.ne.s32.totalorder %s134, %s135
      %p146 = scmp.eq.s32.totalorder %s18, 0
      %p147 = por %p145, %p146
      %p148 = scmp.ne.s32.totalorder %s134, %s135
      %p149 = scmp.eq.s32.totalorder %s19, 7
      %p150 = por %p148, %p149
      %p152 = scmp.ne.s32.totalorder %s135, %s151
      %p153 = scmp.eq.s32.totalorder %s19, 0
      %p154 = por %p152, %p153
      %s156 = sadd.s32 %s155, 1
      %p159 = scmp.eq.s32.totalorder %s13, 7
      %p160 = scmp.ne.s32.totalorder %s155, %s157
      %p161 = scmp.eq.s32.totalorder %s13, 0
      %p162 = por %p160, %p161
      %p163 = scmp.ne.s32.totalorder %s155, %s157
      %p164 = scmp.eq.s32.totalorder %s18, 7
      %p165 = por %p163, %p164
      %p166 = scmp.ne.s32.totalorder %s157, %s158
      %p167 = scmp.eq.s32.totalorder %s18, 0
      %p168 = por %p166, %p167
      %p169 = scmp.ne.s32.totalorder %s157, %s158
      %p170 = scmp.eq.s32.totalorder %s19, 7
      %p171 = por %p169, %p170
      %p173 = scmp.ne.s32.totalorder %s158, %s172
      %p174 = scmp.eq.s32.totalorder %s19, 0
      %p175 = por %p173, %p174
      %s177 = sadd.s32 %s176, 1
      %p180 = scmp.eq.s32.totalorder %s13, 7
      %p181 = scmp.ne.s32.totalorder %s176, %s178
      %p182 = scmp.eq.s32.totalorder %s13, 0
      %p183 = por %p181, %p182
      %p184 = scmp.ne.s32.totalorder %s176, %s178
      %p185 = scmp.eq.s32.totalorder %s18, 7
      %p186 = por %p184, %p185
      %p187 = scmp.ne.s32.totalorder %s178, %s179
      %p188 = scmp.eq.s32.totalorder %s18, 0
      %p189 = por %p187, %p188
      %p190 = scmp.ne.s32.totalorder %s178, %s179
      %p191 = scmp.eq.s32.totalorder %s19, 7
      %p192 = por %p190, %p191
      %p194 = scmp.ne.s32.totalorder %s179, %s193
      %p195 = scmp.eq.s32.totalorder %s19, 0
      %p196 = por %p194, %p195
      %s197 = ssub.s32 %s20, %s32
      %p198 = scmp.eq.s32.totalorder %s197, 0
      %s200 = sadd.s32 %s199, 1
      %s201 = scalar_select %p198, %s199, %s200
      %p204 = pneg %p198
      %p205 = scmp.eq.s32.totalorder %s13, 7
      %p206 = por %p204, %p205
      %p207 = scmp.ne.s32.totalorder %s199, %s202
      %p208 = scmp.eq.s32.totalorder %s13, 0
      %p209 = por %p207, %p208
      %p210 = scmp.ne.s32.totalorder %s199, %s202
      %p211 = scmp.eq.s32.totalorder %s18, 7
      %p212 = por %p210, %p211
      %p213 = scmp.ne.s32.totalorder %s202, %s203
      %p214 = scmp.eq.s32.totalorder %s18, 0
      %p215 = por %p213, %p214
      %p216 = scmp.ne.s32.totalorder %s202, %s203
      %p217 = scmp.eq.s32.totalorder %s19, 7
      %p218 = por %p216, %p217
      %p220 = scmp.ne.s32.totalorder %s203, %s219
      %p221 = scmp.eq.s32.totalorder %s19, 0
      %p222 = por %p220, %p221
      %p223 = scmp.le.s32.totalorder 1, %s13
      %p224 = scmp.lt.s32.totalorder %s13, 9
      %p225 = pnand %p223, %p224
      %p226 = pneg %p225
      // Predicated region
      $region9: #{bert_forward.12} parent=5 // pred_check
        _
      $region10: #{bert_forward.12} parent=5 // pred_check_branch
        %228 = sbr.rel (%p225) target = $region12
      $region11: #{bert_forward.12} parent=5 // pred_region
        %s229 = ssub.s32 %s13, 1
        // Predicated region
        $region13: #{bert_forward.12} parent=11 // pred_check
          %p230 = pneg %p100
        $region14: #{bert_forward.12} parent=11 // pred_check_branch
          %232 = sbr.rel (%p230) target = $region16
        $region15: #{bert_forward.12} parent=11 // pred_region
          _
        $region16: #{bert_forward.12} parent=11 // pred_fallthru
          _
        // Predicated region
        $region17: #{bert_forward.12} parent=11 // pred_check
          %p233 = pneg %p121
        $region18: #{bert_forward.12} parent=11 // pred_check_branch
          %235 = sbr.rel (%p233) target = $region20
        $region19: #{bert_forward.12} parent=11 // pred_region
          _
        $region20: #{bert_forward.12} parent=11 // pred_fallthru
          _
        // Predicated region
        $region21: #{bert_forward.12} parent=11 // pred_check
          %p236 = pneg %p168
        $region22: #{bert_forward.12} parent=11 // pred_check_branch
          %238 = sbr.rel (%p236) target = $region24
        $region23: #{bert_forward.12} parent=11 // pred_region
          _
        $region24: #{bert_forward.12} parent=11 // pred_fallthru
          _
        // Predicated region
        $region25: #{bert_forward.12} parent=11 // pred_check
          %p239 = pneg %p189
        $region26: #{bert_forward.12} parent=11 // pred_check_branch
          %241 = sbr.rel (%p239) target = $region28
        $region27: #{bert_forward.12} parent=11 // pred_region
          _
        $region28: #{bert_forward.12} parent=11 // pred_fallthru
          _
      $region12: #{bert_forward.12} parent=5 // pred_fallthru
        _
      %p242 = scmp.lt.s32.totalorder %s13, 8
      // Predicated region
      $region29: #{bert_forward.12} parent=5 // pred_check
        %p243 = pneg %p242
      $region30: #{bert_forward.12} parent=5 // pred_check_branch
        %245 = sbr.rel (%p243) target = $region32
      $region31: #{bert_forward.12} parent=5 // pred_region
        // Predicated region
        $region33: #{bert_forward.12} parent=31 // pred_check
          %p246 = pneg %p47
        $region34: #{bert_forward.12} parent=31 // pred_check_branch
          %248 = sbr.rel (%p246) target = $region36
        $region35: #{bert_forward.12} parent=31 // pred_region
          %s249 = sand.u32 %s37, 1
          %s250 = sand.u32 %s37, 1
          %s251 = smul.addr %s250, 16
          %s252 = scalar_lea.vmem [#allocation3], %s251
          %s253 = smul.addr %s20, 32
          %s254 = sadd.s32 %s21, %s253
          %s255 = smul.addr %s254, 2
          %s256 = scalar_lea.vmem %s0, %s255
          // Predicated region
          $region37: #{bert_forward.12} parent=35 // pred_check
            _
          $region38: #{bert_forward.12} parent=35 // pred_check_branch
            %258 = sbr.rel (0) target = $region40
          $region39: #{bert_forward.12} parent=35 // pred_region
            // Predicated region
            $region41: #{bert_forward.12} parent=39 // pred_check
              _
            $region42: #{bert_forward.12} parent=39 // pred_check_branch
              %260 = sbr.rel target = $region44
            $region43: #{bert_forward.12} parent=39 // pred_region
              // Predicated region
              $region56: #{bert_forward.12} parent=43 // pred_check
                _
              $region57: #{bert_forward.12} parent=43 // pred_check_branch
                %289 = sbr.rel (0) target = $region59
              $region58: #{bert_forward.12} parent=43 // pred_region
                loop: start=0, step=1, limit=1
                $region60: #{bert_forward.12} parent=58 // loop_pre_header
                  _
                $region61: #{bert_forward.12} parent=58 // loop_header
                  %s291 = sphi 0, %s295
                  %p292 = scmp.ge.s32.totalorder %s291, 1
                  %s296 = sphi %s256, %s256
                  %s297 = sphi %s252, %s252
                $region62: #{bert_forward.12} parent=58 // loop_header_branch
                  %294 = sbr.rel (%p292) target = $region66
                $region63: #{bert_forward.12} parent=58 // loop_body
                  _
                $region64: #{bert_forward.12} parent=58 // loop_footer
                  %s295 = sadd.s32 1, %s291
                $region65: #{bert_forward.12} parent=58 // loop_footer_branch
                  %290 = sbr.rel target = $region61
                $region66: #{bert_forward.12} parent=58 // loop_exit
                  _
                loop: start=0, step=1, limit=1
                $region67: #{bert_forward.12} parent=58 // loop_pre_header
                  _
                $region68: #{bert_forward.12} parent=58 // loop_header
                  %s300 = sphi 0, %s304
                  %p301 = scmp.ge.s32.totalorder %s300, 1
                  %s305 = sphi %s256, %s256
                  %s306 = sphi %s252, %s252
                $region69: #{bert_forward.12} parent=58 // loop_header_branch
                  %303 = sbr.rel (%p301) target = $region73
                $region70: #{bert_forward.12} parent=58 // loop_body
                  %v307 = vld [vmem:[%s305] sm:$0x3]
                  %308 = vst [vmem:[%s306] sm:$0x3] %v307
                  %v309 = vld [vmem:[%s305 + $0x8] sm:$0x3]
                  %310 = vst [vmem:[%s306 + $0x2] sm:$0x3] %v309
                  %v311 = vld [vmem:[%s305 + $0x10] sm:$0x3]
                  %312 = vst [vmem:[%s306 + $0x4] sm:$0x3] %v311
                  %v313 = vld [vmem:[%s305 + $0x18] sm:$0x3]
                  %314 = vst [vmem:[%s306 + $0x6] sm:$0x3] %v313
                  %v315 = vld [vmem:[%s305 + $0x20] sm:$0x3]
                  %316 = vst [vmem:[%s306 + $0x8] sm:$0x3] %v315
                  %v317 = vld [vmem:[%s305 + $0x28] sm:$0x3]
                  %318 = vst [vmem:[%s306 + $0xa] sm:$0x3] %v317
                  %v319 = vld [vmem:[%s305 + $0x30] sm:$0x3]
                  %320 = vst [vmem:[%s306 + $0xc] sm:$0x3] %v319
                  %v321 = vld [vmem:[%s305 + $0x38] sm:$0x3]
                  %322 = vst [vmem:[%s306 + $0xe] sm:$0x3] %v321
                $region71: #{bert_forward.12} parent=58 // loop_footer
                  %s304 = sadd.s32 1, %s300
                $region72: #{bert_forward.12} parent=58 // loop_footer_branch
                  %299 = sbr.rel target = $region68
                $region73: #{bert_forward.12} parent=58 // loop_exit
                  _
              $region59: #{bert_forward.12} parent=43 // pred_fallthru
                _
            $region44: #{bert_forward.12} parent=39 // pred_fallthru
              _
            // Predicated region
            $region45: #{bert_forward.12} parent=39 // pred_check
              _
            $region46: #{bert_forward.12} parent=39 // pred_check_branch
              %262 = sbr.rel (0) target = $region48
            $region47: #{bert_forward.12} parent=39 // pred_region
              loop: start=0, step=1, limit=1
              $region49: #{bert_forward.12} parent=47 // loop_pre_header
                _
              $region50: #{bert_forward.12} parent=47 // loop_header
                %s265 = sphi 0, %s269
                %p266 = scmp.ge.s32.totalorder %s265, 1
                %s270 = sphi %s256, %s256
                %s271 = sphi %s252, %s252
              $region51: #{bert_forward.12} parent=47 // loop_header_branch
                %268 = sbr.rel (%p266) target = $region55
              $region52: #{bert_forward.12} parent=47 // loop_body
                %v272 = vld [vmem:[%s270] sm:$0x3]
                %273 = vst [vmem:[%s271] sm:$0x3] %v272
                %v274 = vld [vmem:[%s270 + $0x8] sm:$0x3]
                %275 = vst [vmem:[%s271 + $0x2] sm:$0x3] %v274
                %v276 = vld [vmem:[%s270 + $0x10] sm:$0x3]
                %277 = vst [vmem:[%s271 + $0x4] sm:$0x3] %v276
                %v278 = vld [vmem:[%s270 + $0x18] sm:$0x3]
                %279 = vst [vmem:[%s271 + $0x6] sm:$0x3] %v278
                %v280 = vld [vmem:[%s270 + $0x20] sm:$0x3]
                %281 = vst [vmem:[%s271 + $0x8] sm:$0x3] %v280
                %v282 = vld [vmem:[%s270 + $0x28] sm:$0x3]
                %283 = vst [vmem:[%s271 + $0xa] sm:$0x3] %v282
                %v284 = vld [vmem:[%s270 + $0x30] sm:$0x3]
                %285 = vst [vmem:[%s271 + $0xc] sm:$0x3] %v284
                %v286 = vld [vmem:[%s270 + $0x38] sm:$0x3]
                %287 = vst [vmem:[%s271 + $0xe] sm:$0x3] %v286
              $region53: #{bert_forward.12} parent=47 // loop_footer
                %s269 = sadd.s32 1, %s265
              $region54: #{bert_forward.12} parent=47 // loop_footer_branch
                %264 = sbr.rel target = $region50
              $region55: #{bert_forward.12} parent=47 // loop_exit
                _
            $region48: #{bert_forward.12} parent=39 // pred_fallthru
              _
          $region40: #{bert_forward.12} parent=35 // pred_fallthru
            _
          %323 = vnop
        $region36: #{bert_forward.12} parent=31 // pred_fallthru
          _
        // Predicated region
        $region74: #{bert_forward.12} parent=31 // pred_check
          %p324 = pneg %p73
        $region75: #{bert_forward.12} parent=31 // pred_check_branch
          %326 = sbr.rel (%p324) target = $region77
        $region76: #{bert_forward.12} parent=31 // pred_region
          %p327 = scmp.lt.s32.totalorder %s20, 1
          %s328 = scalar_select %p327, %s20, 1
          %s329 = scalar_lea.vmem %s1, %s328
        $region77: #{bert_forward.12} parent=31 // pred_fallthru
          _
        // Predicated region
        $region78: #{bert_forward.12} parent=31 // pred_check
          %p330 = pneg %p141
        $region79: #{bert_forward.12} parent=31 // pred_check_branch
          %332 = sbr.rel (%p330) target = $region81
        $region80: #{bert_forward.12} parent=31 // pred_region
          %p333 = scmp.lt.s32.totalorder %s20, 1
          %s334 = scalar_select %p333, %s20, 1
          %s335 = smul.addr %s334, 4
          %s336 = scalar_lea.vmem %s4, %s335
        $region81: #{bert_forward.12} parent=31 // pred_fallthru
          _
      $region32: #{bert_forward.12} parent=5 // pred_fallthru
        _
      %p337 = scmp.le.s32.totalorder 1, %s13
      %p338 = scmp.lt.s32.totalorder %s13, 9
      %p339 = pnand %p337, %p338
      %p340 = pneg %p339
      // Predicated region
      $region82: #{bert_forward.12} parent=5 // pred_check
        _
      $region83: #{bert_forward.12} parent=5 // pred_check_branch
        %342 = sbr.rel (%p339) target = $region85
      $region84: #{bert_forward.12} parent=5 // pred_region
        %s343 = ssub.s32 %s13, 1
        %s344 = sand.u32 %s40, 1
        %s345 = sand.u32 %s40, 1
        %s346 = smul.addr %s345, 16
        %s347 = scalar_lea.vmem [#allocation3], %s346
        // Predicated region
        $region86: #{bert_forward.12} parent=84 // pred_check
          %p348 = pneg %p53
        $region87: #{bert_forward.12} parent=84 // pred_check_branch
          %350 = sbr.rel (%p348) target = $region89
        $region88: #{bert_forward.12} parent=84 // pred_region
          _
        $region89: #{bert_forward.12} parent=84 // pred_fallthru
          _
        %s351 = sand.u32 %s40, 1
        %s352 = sand.u32 %s40, 1
        %s353 = smul.addr %s352, 16
        %s354 = scalar_lea.vmem [#allocation3], %s353
        %p355 = pneg %p53
        %p356 = pneg %p50
        %p357 = scmp.lt.s32.totalorder %s22, 1
        %s358 = scalar_select %p357, %s22, 1
        %s359 = scalar_lea.vmem %s1, %s358
        %p360 = pneg %p79
        %p361 = pneg %p76
        %p362 = pneg %p100
        %p363 = pneg %p97
        %p364 = pneg %p121
        %p365 = pneg %p118
        %p366 = scmp.lt.s32.totalorder %s22, 1
        %s367 = scalar_select %p366, %s22, 1
        %s368 = smul.addr %s367, 4
        %s369 = scalar_lea.vmem %s4, %s368
        %p370 = pneg %p147
        %p371 = pneg %p144
        %p372 = pneg %p168
        %p373 = pneg %p165
        %p374 = pneg %p189
        %p375 = pneg %p186
        %p376 = pneg %p215
        %p377 = pneg %p212
        %p378 = scmp.lt.s32.totalorder %s22, 1
        %s379 = scalar_select %p378, %s22, 1
        %s380 = smul.addr %s379, 4
        %s381 = scalar_lea.vmem %s7, %s380
        %p382 = scmp.lt.s32.totalorder %s22, 1
        %s383 = scalar_select %p382, %s22, 1
        %s384 = scalar_lea.vmem %s1, %s383
        %p385 = scmp.lt.s32.totalorder %s22, 1
        %s386 = scalar_select %p385, %s22, 1
        %s387 = smul.addr %s386, 4
        %s388 = scalar_lea.vmem %s4, %s387
        %p389 = scmp.lt.s32.totalorder %s22, 1
        %s390 = scalar_select %p389, %s22, 1
        %s391 = smul.addr %s390, 4
        %s392 = scalar_lea.vmem %s7, %s391
        %p394 = scmp.eq.s32.totalorder %s23, 0
        // Predicated region
        $region90: #{bert_forward.12} parent=84 // pred_check
          %p395 = pneg %p394
        $region91: #{bert_forward.12} parent=84 // pred_check_branch
          %397 = sbr.rel (%p395) target = $region93
        $region92: #{bert_forward.12} parent=84 // pred_region
          %vm398 = vcmask 261120
          %399 = vst.msk [vmem:[#allocation2] sm:$0xff] %vm398, 0.0
        $region93: #{bert_forward.12} parent=84 // pred_fallthru
          _
        %v400 = vld [vmem:[%s347] sm:$0x1]
        %v401 = vld [vmem:[%s347 + $0x2] sm:$0x1]
        %v402 = vld [vmem:[%s347 + $0x4] sm:$0x1]
        %v403 = vld [vmem:[%s347 + $0x6] sm:$0x1]
        %v404 = vld [vmem:[%s347 + $0x8] sm:$0x1]
        %v405 = vld [vmem:[%s347 + $0xa] sm:$0x1]
        %v406 = vld [vmem:[%s347 + $0xc] sm:$0x1]
        %v407 = vld [vmem:[%s347 + $0xe] sm:$0x1]
        %v408 = vld [vmem:[%s347] sm:$0x2]
        %v409 = vld [vmem:[%s347 + $0x2] sm:$0x2]
        %v410 = vld [vmem:[%s347 + $0x4] sm:$0x2]
        %v411 = vld [vmem:[%s347 + $0x6] sm:$0x2]
        %v412 = vld [vmem:[%s347 + $0x8] sm:$0x2]
        %v413 = vld [vmem:[%s347 + $0xa] sm:$0x2]
        %v414 = vld [vmem:[%s347 + $0xc] sm:$0x2]
        %v415 = vld [vmem:[%s347 + $0xe] sm:$0x2]
        %v425 = vunpack.c.l.s4 1983009808
        %v426 = vunpack.c.0.s8 %v425
        %v427 = vlaneseq
        %v428 = vshrl.u32 %v427, 7
        %v429 = vsub.s32 %v426, %v428
        %v430 = vrot.slane %v400, %v429
        %v432 = vunpack.c.l.s4 1983009808
        %v433 = vunpack.c.0.s8 %v432
        %v434 = vlaneseq
        %v435 = vshrl.u32 %v434, 7
        %v436 = vsub.s32 %v433, %v435
        %v437 = vrot.slane %v401, %v436
        %v439 = vunpack.c.l.s4 1983009808
        %v440 = vunpack.c.0.s8 %v439
        %v441 = vlaneseq
        %v442 = vshrl.u32 %v441, 7
        %v443 = vsub.s32 %v440, %v442
        %v444 = vrot.slane %v402, %v443
        %v446 = vunpack.c.l.s4 1983009808
        %v447 = vunpack.c.0.s8 %v446
        %v448 = vlaneseq
        %v449 = vshrl.u32 %v448, 7
        %v450 = vsub.s32 %v447, %v449
        %v451 = vrot.slane %v403, %v450
        %v453 = vunpack.c.l.s4 1983009808
        %v454 = vunpack.c.0.s8 %v453
        %v455 = vlaneseq
        %v456 = vshrl.u32 %v455, 7
        %v457 = vsub.s32 %v454, %v456
        %v458 = vrot.slane %v404, %v457
        %v460 = vunpack.c.l.s4 1983009808
        %v461 = vunpack.c.0.s8 %v460
        %v462 = vlaneseq
        %v463 = vshrl.u32 %v462, 7
        %v464 = vsub.s32 %v461, %v463
        %v465 = vrot.slane %v405, %v464
        %v467 = vunpack.c.l.s4 1983009808
        %v468 = vunpack.c.0.s8 %v467
        %v469 = vlaneseq
        %v470 = vshrl.u32 %v469, 7
        %v471 = vsub.s32 %v468, %v470
        %v472 = vrot.slane %v406, %v471
        %v474 = vunpack.c.l.s4 1983009808
        %v475 = vunpack.c.0.s8 %v474
        %v476 = vlaneseq
        %v477 = vshrl.u32 %v476, 7
        %v478 = vsub.s32 %v475, %v477
        %v479 = vrot.slane %v407, %v478
        %v480 = vunpack.c.l.b16 %v430
        %v481 = vunpack.c.l.b16 %v437
        %v482 = vunpack.c.l.b16 %v444
        %v483 = vunpack.c.l.b16 %v451
        %v484 = vunpack.c.l.b16 %v458
        %v485 = vunpack.c.l.b16 %v465
        %v486 = vunpack.c.l.b16 %v472
        %v487 = vunpack.c.l.b16 %v479
        %v488 = vrot.slane %v481, 7
        %vm489 = vcmask 1041409
        %v490 = vsel %vm489, %v488, %v480
        %v491 = vrot.slane %v482, 6
        %vm492 = vcmask 1042434
        %v493 = vsel %vm492, %v491, %v490
        %v494 = vrot.slane %v483, 5
        %vm495 = vcmask 1043459
        %v496 = vsel %vm495, %v494, %v493
        %v497 = vrot.slane %v484, 4
        %vm498 = vcmask 1044484
        %v499 = vsel %vm498, %v497, %v496
        %v500 = vrot.slane %v485, 3
        %vm501 = vcmask 1045509
        %v502 = vsel %vm501, %v500, %v499
        %v503 = vrot.slane %v486, 2
        %vm504 = vcmask 1046534
        %v505 = vsel %vm504, %v503, %v502
        %v506 = vrot.slane %v487, 1
        %vm507 = vcmask 1047559
        %v508 = vsel %vm507, %v506, %v505
        %v509 = vpack.c.b16 %v508, %v508
        %v510 = vrot.slane %v480, 1
        %v511 = vsel %vm489, %v481, %v510
        %v512 = vrot.slane %v482, 7
        %v513 = vsel %vm492, %v512, %v511
        %v514 = vrot.slane %v483, 6
        %v515 = vsel %vm495, %v514, %v513
        %v516 = vrot.slane %v484, 5
        %v517 = vsel %vm498, %v516, %v515
        %v518 = vrot.slane %v485, 4
        %v519 = vsel %vm501, %v518, %v517
        %v520 = vrot.slane %v486, 3
        %v521 = vsel %vm504, %v520, %v519
        %v522 = vrot.slane %v487, 2
        %v523 = vsel %vm507, %v522, %v521
        %v524 = vpack.c.b16 %v523, %v523
        %vm525 = vcmask 64512
        %v527 = vsel %vm525, %v509, 0
        %v530 = vsel %vm525, %v524, 0
        %532 = vmatprep.subr.bf16.mxu0 0
        %533 = vmatpush1.bf16.xpose.msra.mxu0 %v530
        %534 = vmatprep.subr.bf16.mxu0 0
        %535 = vmatpush1.bf16.xpose.msra.mxu0 0
        %536 = vmatprep.subr.bf16.mxu0 0
        %537 = vmatpush1.bf16.xpose.msra.mxu0 0
        %538 = vmatprep.subr.bf16.mxu0 0
        %539 = vmatpush1.bf16.xpose.msra.mxu0 0
        %540 = vmatprep.subr.bf16.mxu0 0
        %541 = vmatpush1.bf16.xpose.msra.mxu0 0
        %542 = vmatprep.subr.bf16.mxu0 0
        %543 = vmatpush1.bf16.xpose.msra.mxu0 0
        %544 = vmatprep.subr.bf16.mxu0 0
        %545 = vmatpush1.bf16.xpose.msra.mxu0 0
        %546 = vmatprep.subr.bf16.mxu0 0
        %547 = vmatpush1.bf16.xpose.msra.mxu0 0
        %548 = vmatprep.subr.bf16.mxu0 0
        %549 = vmatpush1.bf16.xpose.msra.mxu0 0
        %550 = vmatprep.subr.bf16.mxu0 0
        %551 = vmatpush1.bf16.xpose.msra.mxu0 0
        %552 = vmatprep.subr.bf16.mxu0 0
        %553 = vmatpush1.bf16.xpose.msra.mxu0 0
        %554 = vmatprep.subr.bf16.mxu0 0
        %555 = vmatpush1.bf16.xpose.msra.mxu0 0
        %556 = vmatprep.subr.bf16.mxu0 0
        %557 = vmatpush1.bf16.xpose.msra.mxu0 0
        %558 = vmatprep.subr.bf16.mxu0 0
        %559 = vmatpush1.bf16.xpose.msra.mxu0 0
        %560 = vmatprep.subr.bf16.mxu0 0
        %561 = vmatpush1.bf16.xpose.msra.mxu0 0
        %562 = vmatprep.subr.bf16.mxu0 0
        %563 = vmatpush1.bf16.xpose.msra.mxu0 0
        %564 = vmatprep.mubr.bf16.mxu0 0
        %565 = vmatmul.mubr.bf16.gmra.mrb[0].mxu0 %v527
        %v566 = vpop.f32.mrb[0].mxu0
        %v567 = vadd.f32 0.0, %v566
        %v568 = vpop.f32.mrb[0].mxu0
        %v569 = vpop.f32.mrb[0].mxu0
        %v570 = vpop.f32.mrb[0].mxu0
        %571 = vdwg.mxu0
        %v572 = vmul.f32 %v567, 0.35355338
        %v573 = vld [vmem:[%s384] sm:$0x1]
        %v575 = vlaneseq
        %v576 = vshrl.u32 %v575, 7
        %v577 = vsub.s32 0, %v576
        %v578 = vrot.slane %v573, %v577
        %v580 = vadd.f32 %v572, %v578
        %v581 = vsel %vm525, %v580, -inf
        %582 = vmax.xlane.f32.xlu0 %v581
        %v583 = vpop.xlane.xlu0 %582
        %v584 = vsub.f32 %v580, %v583
        %v585 = vmul.f32 %v584, 1.442695
        %v586 = vpow.pop %v585
        %v587 = vsel %vm525, %v586, 0.0
        %588 = vadd.xlane.f32.xlu0 %v587
        %v589 = vpop.xlane.xlu0 %588
        %v590 = vrcp.pop %v589
        %v591 = vmul.f32 %v586, %v590
        %v592 = vpack.c.bf16 %v591, %v591
        %v602 = vunpack.c.l.s4 1983009808
        %v603 = vunpack.c.0.s8 %v602
        %v604 = vlaneseq
        %v605 = vshrl.u32 %v604, 7
        %v606 = vsub.s32 %v603, %v605
        %v607 = vrot.slane %v408, %v606
        %v609 = vunpack.c.l.s4 1983009808
        %v610 = vunpack.c.0.s8 %v609
        %v611 = vlaneseq
        %v612 = vshrl.u32 %v611, 7
        %v613 = vsub.s32 %v610, %v612
        %v614 = vrot.slane %v409, %v613
        %v616 = vunpack.c.l.s4 1983009808
        %v617 = vunpack.c.0.s8 %v616
        %v618 = vlaneseq
        %v619 = vshrl.u32 %v618, 7
        %v620 = vsub.s32 %v617, %v619
        %v621 = vrot.slane %v410, %v620
        %v623 = vunpack.c.l.s4 1983009808
        %v624 = vunpack.c.0.s8 %v623
        %v625 = vlaneseq
        %v626 = vshrl.u32 %v625, 7
        %v627 = vsub.s32 %v624, %v626
        %v628 = vrot.slane %v411, %v627
        %v630 = vunpack.c.l.s4 1983009808
        %v631 = vunpack.c.0.s8 %v630
        %v632 = vlaneseq
        %v633 = vshrl.u32 %v632, 7
        %v634 = vsub.s32 %v631, %v633
        %v635 = vrot.slane %v412, %v634
        %v637 = vunpack.c.l.s4 1983009808
        %v638 = vunpack.c.0.s8 %v637
        %v639 = vlaneseq
        %v640 = vshrl.u32 %v639, 7
        %v641 = vsub.s32 %v638, %v640
        %v642 = vrot.slane %v413, %v641
        %v644 = vunpack.c.l.s4 1983009808
        %v645 = vunpack.c.0.s8 %v644
        %v646 = vlaneseq
        %v647 = vshrl.u32 %v646, 7
        %v648 = vsub.s32 %v645, %v647
        %v649 = vrot.slane %v414, %v648
        %v651 = vunpack.c.l.s4 1983009808
        %v652 = vunpack.c.0.s8 %v651
        %v653 = vlaneseq
        %v654 = vshrl.u32 %v653, 7
        %v655 = vsub.s32 %v652, %v654
        %v656 = vrot.slane %v415, %v655
        %v657 = vunpack.c.l.b16 %v607
        %v658 = vunpack.c.l.b16 %v614
        %v659 = vunpack.c.l.b16 %v621
        %v660 = vunpack.c.l.b16 %v628
        %v661 = vunpack.c.l.b16 %v635
        %v662 = vunpack.c.l.b16 %v642
        %v663 = vunpack.c.l.b16 %v649
        %v664 = vunpack.c.l.b16 %v656
        %v665 = vrot.slane %v657, 2
        %v666 = vrot.slane %v658, 1
        %v667 = vsel %vm489, %v666, %v665
        %v668 = vsel %vm492, %v659, %v667
        %v669 = vrot.slane %v660, 7
        %v670 = vsel %vm495, %v669, %v668
        %v671 = vrot.slane %v661, 6
        %v672 = vsel %vm498, %v671, %v670
        %v673 = vrot.slane %v662, 5
        %v674 = vsel %vm501, %v673, %v672
        %v675 = vrot.slane %v663, 4
        %v676 = vsel %vm504, %v675, %v674
        %v677 = vrot.slane %v664, 3
        %v678 = vsel %vm507, %v677, %v676
        %v679 = vpack.c.b16 %v678, %v678
        %v681 = vsel %vm525, %v592, 0
        %vm683 = vcmask 1043456
        %v685 = vsel %vm683, %v679, 0
        %687 = vmatprep.subr.bf16.mxu0 0
        %688 = vmatpush1.bf16.msra.mxu0 %v685
        %689 = vmatprep.subr.bf16.mxu0 0
        %690 = vmatpush1.bf16.msra.mxu0 0
        %691 = vmatprep.subr.bf16.mxu0 0
        %692 = vmatpush1.bf16.msra.mxu0 0
        %693 = vmatprep.subr.bf16.mxu0 0
        %694 = vmatpush1.bf16.msra.mxu0 0
        %695 = vmatprep.subr.bf16.mxu0 0
        %696 = vmatpush1.bf16.msra.mxu0 0
        %697 = vmatprep.subr.bf16.mxu0 0
        %698 = vmatpush1.bf16.msra.mxu0 0
        %699 = vmatprep.subr.bf16.mxu0 0
        %700 = vmatpush1.bf16.msra.mxu0 0
        %701 = vmatprep.subr.bf16.mxu0 0
        %702 = vmatpush1.bf16.msra.mxu0 0
        %703 = vmatprep.subr.bf16.mxu0 0
        %704 = vmatpush1.bf16.msra.mxu0 0
        %705 = vmatprep.subr.bf16.mxu0 0
        %706 = vmatpush1.bf16.msra.mxu0 0
        %707 = vmatprep.subr.bf16.mxu0 0
        %708 = vmatpush1.bf16.msra.mxu0 0
        %709 = vmatprep.subr.bf16.mxu0 0
        %710 = vmatpush1.bf16.msra.mxu0 0
        %711 = vmatprep.subr.bf16.mxu0 0
        %712 = vmatpush1.bf16.msra.mxu0 0
        %713 = vmatprep.subr.bf16.mxu0 0
        %714 = vmatpush1.bf16.msra.mxu0 0
        %715 = vmatprep.subr.bf16.mxu0 0
        %716 = vmatpush1.bf16.msra.mxu0 0
        %717 = vmatprep.subr.bf16.mxu0 0
        %718 = vmatpush1.bf16.msra.mxu0 0
        %719 = vmatprep.mubr.bf16.mxu0 0
        %720 = vmatmul.mubr.bf16.gmra.mrb[0].mxu0 %v681
        %v721 = vpop.f32.mrb[0].mxu0
        %v722 = vadd.f32 0.0, %v721
        %v723 = vpop.f32.mrb[0].mxu0
        %v724 = vpop.f32.mrb[0].mxu0
        %v725 = vpop.f32.mrb[0].mxu0
        %726 = vdwg.mxu0
        %v727 = vld [vmem:[#allocation2] sm:$0xff]
        %v728 = vpack.c.bf16 %v722, %v722
        %s729 = smul.addr %s23, 4
        %s730 = scalar_lea.vmem %s2, %s729
        %v731 = vld [vmem:[%s730] sm:$0xf]
        %v733 = vsel %vm525, %v728, 0
        %v736 = vsel %vm683, %v731, 0
        %738 = vmatprep.subr.bf16.mxu0 0
        %739 = vmatpush1.bf16.msra.mxu0 %v736
        %740 = vmatprep.subr.bf16.mxu0 0
        %741 = vmatpush1.bf16.msra.mxu0 0
        %742 = vmatprep.subr.bf16.mxu0 0
        %743 = vmatpush1.bf16.msra.mxu0 0
        %744 = vmatprep.subr.bf16.mxu0 0
        %745 = vmatpush1.bf16.msra.mxu0 0
        %746 = vmatprep.subr.bf16.mxu0 0
        %747 = vmatpush1.bf16.msra.mxu0 0
        %748 = vmatprep.subr.bf16.mxu0 0
        %749 = vmatpush1.bf16.msra.mxu0 0
        %750 = vmatprep.subr.bf16.mxu0 0
        %751 = vmatpush1.bf16.msra.mxu0 0
        %752 = vmatprep.subr.bf16.mxu0 0
        %753 = vmatpush1.bf16.msra.mxu0 0
        %754 = vmatprep.subr.bf16.mxu0 0
        %755 = vmatpush1.bf16.msra.mxu0 0
        %756 = vmatprep.subr.bf16.mxu0 0
        %757 = vmatpush1.bf16.msra.mxu0 0
        %758 = vmatprep.subr.bf16.mxu0 0
        %759 = vmatpush1.bf16.msra.mxu0 0
        %760 = vmatprep.subr.bf16.mxu0 0
        %761 = vmatpush1.bf16.msra.mxu0 0
        %762 = vmatprep.subr.bf16.mxu0 0
        %763 = vmatpush1.bf16.msra.mxu0 0
        %764 = vmatprep.subr.bf16.mxu0 0
        %765 = vmatpush1.bf16.msra.mxu0 0
        %766 = vmatprep.subr.bf16.mxu0 0
        %767 = vmatpush1.bf16.msra.mxu0 0
        %768 = vmatprep.subr.bf16.mxu0 0
        %769 = vmatpush1.bf16.msra.mxu0 0
        %770 = vmatprep.mubr.bf16.mxu0 0
        %771 = vmatmul.mubr.bf16.gmra.mrb[0].mxu0 %v733
        %v772 = vpop.f32.mrb[0].mxu0
        %v773 = vadd.f32 0.0, %v772
        %v774 = vpop.f32.mrb[0].mxu0
        %v775 = vpop.f32.mrb[0].mxu0
        %v776 = vpop.f32.mrb[0].mxu0
        %777 = vdwg.mxu0
        %v778 = vadd.f32 %v727, %v773
        %vm779 = vcmask 261120
        %780 = vst.msk [vmem:[#allocation2] sm:$0xff] %vm779, %v778
        %p781 = scmp.eq.s32.totalorder %s23, 3
        // Predicated region
        $region94: #{bert_forward.12} parent=84 // pred_check
          %p782 = pneg %p781
        $region95: #{bert_forward.12} parent=84 // pred_check_branch
          %784 = sbr.rel (%p782) target = $region97
        $region96: #{bert_forward.12} parent=84 // pred_region
          %v785 = vld [vmem:[#allocation2] sm:$0xff]
          %v786 = vld [vmem:[%s3] sm:$0x1]
          %v788 = vlaneseq
          %v789 = vshrl.u32 %v788, 7
          %v790 = vsub.s32 0, %v789
          %v791 = vrot.slane %v786, %v790
          %v793 = vadd.f32 %v785, %v791
          %v794 = vld [vmem:[%s388] sm:$0xf]
          %v795 = vunpack.c.l.bf16 %v794
          %v796 = vadd.f32 %v793, %v795
          %v797 = vsel %vm779, %v796, 0.0
          %798 = vadd.xlane.f32.xlu0 %v797
          %v799 = vpop.xlane.xlu0 %798
          %v800 = vrcp.pop 32.0
          %v801 = vmul.f32 %v799, %v800
          %v802 = vsub.f32 %v796, %v801
          %v803 = vmul.f32 %v802, %v802
          %v804 = vsel %vm779, %v803, 0.0
          %805 = vadd.xlane.f32.xlu0 %v804
          %v806 = vpop.xlane.xlu0 %805
          %v807 = vmul.f32 %v806, %v800
          %v808 = vadd.f32 %v807, 1e-05
          %v809 = vrsqrt.pop %v808
          %v810 = vmul.f32 %v802, %v809
          %v811 = vld [vmem:[%s5] sm:$0x1]
          %v813 = vlaneseq
          %v814 = vshrl.u32 %v813, 7
          %v815 = vsub.s32 0, %v814
          %v816 = vrot.slane %v811, %v815
          %v818 = vmul.f32 %v810, %v816
          %v819 = vld [vmem:[%s6] sm:$0x1]
          %v821 = vlaneseq
          %v822 = vshrl.u32 %v821, 7
          %v823 = vsub.s32 0, %v822
          %v824 = vrot.slane %v819, %v823
          %v826 = vadd.f32 %v818, %v824
          %v827 = vpack.c.bf16 %v826, %v826
          %vm828 = vcmask 257024
          %829 = vst.msk [vmem:[%s392] sm:$0xf] %vm828, %v827
        $region97: #{bert_forward.12} parent=84 // pred_fallthru
          _
        %p830 = scmp.lt.s32.totalorder %s22, 1
        %s831 = scalar_select %p830, %s22, 1
        %s832 = smul.addr %s831, 4
        %s833 = scalar_lea.vmem %s7, %s832
        // Predicated region
        $region98: #{bert_forward.12} parent=84 // pred_check
          %p834 = pneg %p212
        $region99: #{bert_forward.12} parent=84 // pred_check_branch
          %836 = sbr.rel (%p834) target = $region101
        $region100: #{bert_forward.12} parent=84 // pred_region
          _
        $region101: #{bert_forward.12} parent=84 // pred_fallthru
          _
      $region85: #{bert_forward.12} parent=5 // pred_fallthru
        _
      %p837 = scmp.le.s32.totalorder 2, %s13
      // Predicated region
      $region102: #{bert_forward.12} parent=5 // pred_check
        %p838 = pneg %p837
      $region103: #{bert_forward.12} parent=5 // pred_check_branch
        %840 = sbr.rel (%p838) target = $region105
      $region104: #{bert_forward.12} parent=5 // pred_region
        %s841 = ssub.s32 %s13, 2
        // Predicated region
        $region106: #{bert_forward.12} parent=104 // pred_check
          %p842 = pneg %p218
        $region107: #{bert_forward.12} parent=104 // pred_check_branch
          %844 = sbr.rel (%p842) target = $region109
        $region108: #{bert_forward.12} parent=104 // pred_region
          %p845 = scmp.lt.s32.totalorder %s24, 1
          %s846 = scalar_select %p845, %s24, 1
          %s847 = smul.addr %s846, 4
          %s848 = scalar_lea.vmem %s7, %s847
        $region109: #{bert_forward.12} parent=104 // pred_fallthru
          _
      $region105: #{bert_forward.12} parent=5 // pred_fallthru
        _
    $region6: #{bert_forward.12} parent=1 // loop_footer
      %s17 = sadd.s32 1, %s13
    $region7: #{bert_forward.12} parent=1 // loop_footer_branch
      %12 = sbr.rel target = $region3
    $region8: #{bert_forward.12} parent=1 // loop_exit
      _

// kernel: bert_forward.14
$region0: #{bert_forward.14}
  #allocation0 [shape = 'u32[]', space=smem, size = 0x4, offset = 0x4, fixed_abs, tag = 'smem constant byte address 0x4 - core index']
  #allocation1 [shape = 'u32[144,128]{1,0:T(1,128)}', space=vmem, size = 0x12000, scoped, tag = 'internal scratch']
  #allocation2 [shape = 'f32[16,32]{1,0:T(8,128)}', space=vmem, size = 0x2000, scoped, tag = 'scratch operand']
  %s0 = inlined_call_operand.vmem [shape: bf16[16,64], index: 0, kind: input, shape index: {}]
  %s1 = inlined_call_operand.vmem [shape: bf16[64,32], index: 1, kind: input, shape index: {}]
  %s2 = inlined_call_operand.vmem [shape: f32[1,32], index: 2, kind: input, shape index: {}]
  %s3 = inlined_call_operand.vmem [shape: bf16[16,32], index: 3, kind: input, shape index: {}]
  %s4 = inlined_call_operand.vmem [shape: f32[1,32], index: 4, kind: input, shape index: {}]
  %s5 = inlined_call_operand.vmem [shape: f32[1,32], index: 5, kind: input, shape index: {}]
  %s6 = inlined_call_operand.vmem [shape: bf16[16,32], index: 6, kind: output, shape index: {}]
  %s7 = sld [smem:[#allocation0]]
  $region42: #{bert_forward.14} parent=0
    _
  %s9 = ssub.s32 1, %s7
  %s10 = scalar_select 0, %s9, %s7
  // Predicated region
  $region2: #{bert_forward.14} parent=0 // pred_check
    _
  $region3: #{bert_forward.14} parent=0 // pred_check_branch
    %12 = sbr.rel (0) target = $region5
  $region4: #{bert_forward.14} parent=0 // pred_region
    _
  $region5: #{bert_forward.14} parent=0 // pred_fallthru
    _
  // Predicated region
  $region6: #{bert_forward.14} parent=0 // pred_check
    _
  $region7: #{bert_forward.14} parent=0 // pred_check_branch
    %14 = sbr.rel (0) target = $region9
  $region8: #{bert_forward.14} parent=0 // pred_region
    _
  $region9: #{bert_forward.14} parent=0 // pred_fallthru
    _
  // Predicated region
  $region10: #{bert_forward.14} parent=0 // pred_check
    _
  $region11: #{bert_forward.14} parent=0 // pred_check_branch
    %16 = sbr.rel (0) target = $region13
  $region12: #{bert_forward.14} parent=0 // pred_region
    _
  $region13: #{bert_forward.14} parent=0 // pred_fallthru
    _
  // Predicated region
  $region14: #{bert_forward.14} parent=0 // pred_check
    _
  $region15: #{bert_forward.14} parent=0 // pred_check_branch
    %18 = sbr.rel (0) target = $region17
  $region16: #{bert_forward.14} parent=0 // pred_region
    _
  $region17: #{bert_forward.14} parent=0 // pred_fallthru
    _
  // Predicated region
  $region18: #{bert_forward.14} parent=0 // pred_check
    _
  $region19: #{bert_forward.14} parent=0 // pred_check_branch
    %20 = sbr.rel (0) target = $region21
  $region20: #{bert_forward.14} parent=0 // pred_region
    _
  $region21: #{bert_forward.14} parent=0 // pred_fallthru
    _
  // Predicated region
  $region22: #{bert_forward.14} parent=0 // pred_check
    _
  $region23: #{bert_forward.14} parent=0 // pred_check_branch
    %22 = sbr.rel (0) target = $region25
  $region24: #{bert_forward.14} parent=0 // pred_region
    _
  $region25: #{bert_forward.14} parent=0 // pred_fallthru
    _
  %p24 = scmp.eq.s32.totalorder 0, 0
  // Predicated region
  $region26: #{bert_forward.14} parent=0 // pred_check
    %p25 = pneg %p24
  $region27: #{bert_forward.14} parent=0 // pred_check_branch
    %27 = sbr.rel (%p25) target = $region29
  $region28: #{bert_forward.14} parent=0 // pred_region
    %vm28 = vcmask 261120
    %29 = vst.msk [vmem:[#allocation2] sm:$0xff] %vm28, 0.0
    %30 = vst.msk [vmem:[#allocation2 + $0x8] sm:$0xff] %vm28, 0.0
  $region29: #{bert_forward.14} parent=0 // pred_fallthru
    _
  %v31 = vld [vmem:[#allocation2] sm:$0xff]
  %v32 = vld [vmem:[#allocation2 + $0x8] sm:$0xff]
  %v33 = vld [vmem:[%s0] sm:$0xf]
  %v34 = vld [vmem:[%s0 + $0x4] sm:$0xf]
  %v35 = vld [vmem:[%s1] sm:$0xf]
  %v36 = vld [vmem:[%s1 + $0x4] sm:$0xf]
  %v37 = vld [vmem:[%s1 + $0x8] sm:$0xf]
  %v38 = vld [vmem:[%s1 + $0xc] sm:$0xf]
  %v39 = vld [vmem:[%s1 + $0x10] sm:$0xf]
  %v40 = vld [vmem:[%s1 + $0x14] sm:$0xf]
  %v41 = vld [vmem:[%s1 + $0x18] sm:$0xf]
  %v42 = vld [vmem:[%s1 + $0x1c] sm:$0xf]
  %v45 = vunpack.c.l.b16 %v33
  %v46 = vunpack.c.l.b16 %v34
  %v47 = vpack.c.b16 %v46, %v45
  %v56 = vunpack.c.l.b16 %v35
  %v57 = vunpack.c.l.b16 %v36
  %v58 = vunpack.c.l.b16 %v37
  %v59 = vunpack.c.l.b16 %v38
  %v60 = vunpack.c.l.b16 %v39
  %v61 = vunpack.c.l.b16 %v40
  %v62 = vunpack.c.l.b16 %v41
  %v63 = vunpack.c.l.b16 %v42
  %v64 = vpack.c.b16 %v57, %v56
  %v65 = vpack.c.b16 %v59, %v58
  %v66 = vpack.c.b16 %v61, %v60
  %v67 = vpack.c.b16 %v63, %v62
  %vm72 = vcmask 523264
  %v74 = vsel %vm72, %v47, 0
  %76 = vmatprep.subr.bf16.mxu0 0
  %77 = vmatpush1.bf16.msra.mxu0 %v64
  %78 = vmatprep.subr.bf16.mxu0 0
  %79 = vmatpush1.bf16.msra.mxu0 %v65
  %80 = vmatprep.subr.bf16.mxu0 0
  %81 = vmatpush1.bf16.msra.mxu0 %v66
  %82 = vmatprep.subr.bf16.mxu0 0
  %83 = vmatpush1.bf16.msra.mxu0 %v67
  %84 = vmatprep.subr.bf16.mxu0 0
  %85 = vmatpush1.bf16.msra.mxu0 0
  %86 = vmatprep.subr.bf16.mxu0 0
  %87 = vmatpush1.bf16.msra.mxu0 0
  %88 = vmatprep.subr.bf16.mxu0 0
  %89 = vmatpush1.bf16.msra.mxu0 0
  %90 = vmatprep.subr.bf16.mxu0 0
  %91 = vmatpush1.bf16.msra.mxu0 0
  %92 = vmatprep.subr.bf16.mxu0 0
  %93 = vmatpush1.bf16.msra.mxu0 0
  %94 = vmatprep.subr.bf16.mxu0 0
  %95 = vmatpush1.bf16.msra.mxu0 0
  %96 = vmatprep.subr.bf16.mxu0 0
  %97 = vmatpush1.bf16.msra.mxu0 0
  %98 = vmatprep.subr.bf16.mxu0 0
  %99 = vmatpush1.bf16.msra.mxu0 0
  %100 = vmatprep.subr.bf16.mxu0 0
  %101 = vmatpush1.bf16.msra.mxu0 0
  %102 = vmatprep.subr.bf16.mxu0 0
  %103 = vmatpush1.bf16.msra.mxu0 0
  %104 = vmatprep.subr.bf16.mxu0 0
  %105 = vmatpush1.bf16.msra.mxu0 0
  %106 = vmatprep.subr.bf16.mxu0 0
  %107 = vmatpush1.bf16.msra.mxu0 0
  %108 = vmatprep.mubr.bf16.mxu0 0
  %109 = vmatmul.mubr.bf16.gmra.mrb[0].mxu0 %v74
  %v110 = vpop.f32.mrb[0].mxu0
  %v111 = vadd.f32 0.0, %v110
  %v112 = vpop.f32.mrb[0].mxu0
  %v113 = vpop.f32.mrb[0].mxu0
  %v114 = vadd.f32 0.0, %v113
  %v115 = vpop.f32.mrb[0].mxu0
  %116 = vdwg.mxu0
  %v117 = vadd.f32 %v31, %v111
  %v118 = vadd.f32 %v32, %v114
  %vm119 = vcmask 261120
  %120 = vst.msk [vmem:[#allocation2] sm:$0xff] %vm119, %v117
  %121 = vst.msk [vmem:[#allocation2 + $0x8] sm:$0xff] %vm119, %v118
  // Predicated region
  $region30: #{bert_forward.14} parent=0 // pred_check
    %p122 = pneg %p24
  $region31: #{bert_forward.14} parent=0 // pred_check_branch
    %124 = sbr.rel (%p122) target = $region33
  $region32: #{bert_forward.14} parent=0 // pred_region
    %v125 = vld [vmem:[#allocation2] sm:$0xff]
    %v126 = vld [vmem:[#allocation2 + $0x8] sm:$0xff]
    %v127 = vld [vmem:[%s2] sm:$0x1]
    %v129 = vlaneseq
    %v130 = vshrl.u32 %v129, 7
    %v131 = vsub.s32 0, %v130
    %v132 = vrot.slane %v127, %v131
    %v134 = vadd.f32 %v125, %v132
    %v135 = vadd.f32 %v126, %v132
    %v136 = vld [vmem:[%s3] sm:$0xf]
    %v137 = vld [vmem:[%s3 + $0x4] sm:$0xf]
    %v138 = vunpack.c.l.bf16 %v136
    %v139 = vunpack.c.l.bf16 %v137
    %v140 = vadd.f32 %v134, %v138
    %v141 = vadd.f32 %v135, %v139
    %v142 = vsel %vm119, %v140, 0.0
    %143 = vadd.xlane.f32.xlu0 %v142
    %v144 = vpop.xlane.xlu0 %143
    %v145 = vsel %vm119, %v141, 0.0
    %146 = vadd.xlane.f32.xlu0 %v145
    %v147 = vpop.xlane.xlu0 %146
    %v148 = vrcp.pop 32.0
    %v149 = vmul.f32 %v144, %v148
    %v150 = vmul.f32 %v147, %v148
    %v151 = vsub.f32 %v140, %v149
    %v152 = vsub.f32 %v141, %v150
    %v153 = vmul.f32 %v151, %v151
    %v154 = vmul.f32 %v152, %v152
    %v155 = vsel %vm119, %v153, 0.0
    %156 = vadd.xlane.f32.xlu0 %v155
    %v157 = vpop.xlane.xlu0 %156
    %v158 = vsel %vm119, %v154, 0.0
    %159 = vadd.xlane.f32.xlu0 %v158
    %v160 = vpop.xlane.xlu0 %159
    %v161 = vmul.f32 %v157, %v148
    %v162 = vmul.f32 %v160, %v148
    %v163 = vadd.f32 %v161, 1e-05
    %v164 = vadd.f32 %v162, 1e-05
    %v165 = vrsqrt.pop %v163
    %v166 = vrsqrt.pop %v164
    %v167 = vmul.f32 %v151, %v165
    %v168 = vmul.f32 %v152, %v166
    %v169 = vld [vmem:[%s4] sm:$0x1]
    %v171 = vlaneseq
    %v172 = vshrl.u32 %v171, 7
    %v173 = vsub.s32 0, %v172
    %v174 = vrot.slane %v169, %v173
    %v176 = vmul.f32 %v167, %v174
    %v177 = vmul.f32 %v168, %v174
    %v178 = vld [vmem:[%s5] sm:$0x1]
    %v180 = vlaneseq
    %v181 = vshrl.u32 %v180, 7
    %v182 = vsub.s32 0, %v181
    %v183 = vrot.slane %v178, %v182
    %v185 = vadd.f32 %v176, %v183
    %v186 = vadd.f32 %v177, %v183
    %v187 = vpack.c.bf16 %v186, %v185
    %v189 = vunpack.c.l.b16 %v187
    %v190 = vunpack.c.h.b16 %v187
    %v191 = vpack.c.b16 %v189, %v189
    %v192 = vpack.c.b16 %v190, %v190
    %vm195 = vcmask 257024
    %196 = vst.msk [vmem:[%s6] sm:$0xf] %vm195, %v191
    %197 = vst.msk [vmem:[%s6 + $0x4] sm:$0xf] %vm195, %v192
  $region33: #{bert_forward.14} parent=0 // pred_fallthru
    _
  // Predicated region
  $region34: #{bert_forward.14} parent=0 // pred_check
    _
  $region35: #{bert_forward.14} parent=0 // pred_check_branch
    %199 = sbr.rel (0) target = $region37
  $region36: #{bert_forward.14} parent=0 // pred_region
    _
  $region37: #{bert_forward.14} parent=0 // pred_fallthru
    _
  // Predicated region
  $region38: #{bert_forward.14} parent=0 // pred_check
    _
  $region39: #{bert_forward.14} parent=0 // pred_check_branch
    %201 = sbr.rel (0) target = $region41
  $region40: #{bert_forward.14} parent=0 // pred_region
    _
  $region41: #{bert_forward.14} parent=0 // pred_fallthru
    _

// kernel: bert_forward.19
$region0: #{bert_forward.19}
  #allocation0 [shape = 'u32[]', space=smem, size = 0x4, offset = 0x4, fixed_abs, tag = 'smem constant byte address 0x4 - core index']
  #allocation1 [shape = 'u32[144,128]{1,0:T(1,128)}', space=vmem, size = 0x12000, scoped, tag = 'internal scratch']
  #allocation2 [shape = 'f32[8,32]{1,0:T(8,128)}', space=vmem, size = 0x1000, scoped, tag = 'scratch operand']
  %s0 = inlined_call_operand.vmem [shape: bf16[8,32], index: 0, kind: input, shape index: {}]
  %s1 = inlined_call_operand.vmem [shape: bf16[32,32], index: 1, kind: input, shape index: {}]
  %s2 = inlined_call_operand.vmem [shape: f32[1,32], index: 2, kind: input, shape index: {}]
  %s3 = inlined_call_operand.vmem [shape: bf16[8,32], index: 3, kind: output, shape index: {}]
  %s4 = sld [smem:[#allocation0]]
  $region30: #{bert_forward.19} parent=0
    _
  %s6 = ssub.s32 1, %s4
  %s7 = scalar_select 0, %s6, %s4
  // Predicated region
  $region2: #{bert_forward.19} parent=0 // pred_check
    _
  $region3: #{bert_forward.19} parent=0 // pred_check_branch
    %9 = sbr.rel (0) target = $region5
  $region4: #{bert_forward.19} parent=0 // pred_region
    _
  $region5: #{bert_forward.19} parent=0 // pred_fallthru
    _
  // Predicated region
  $region6: #{bert_forward.19} parent=0 // pred_check
    _
  $region7: #{bert_forward.19} parent=0 // pred_check_branch
    %11 = sbr.rel (0) target = $region9
  $region8: #{bert_forward.19} parent=0 // pred_region
    _
  $region9: #{bert_forward.19} parent=0 // pred_fallthru
    _
  // Predicated region
  $region10: #{bert_forward.19} parent=0 // pred_check
    _
  $region11: #{bert_forward.19} parent=0 // pred_check_branch
    %13 = sbr.rel (0) target = $region13
  $region12: #{bert_forward.19} parent=0 // pred_region
    _
  $region13: #{bert_forward.19} parent=0 // pred_fallthru
    _
  %p15 = scmp.eq.s32.totalorder 0, 0
  // Predicated region
  $region14: #{bert_forward.19} parent=0 // pred_check
    %p16 = pneg %p15
  $region15: #{bert_forward.19} parent=0 // pred_check_branch
    %18 = sbr.rel (%p16) target = $region17
  $region16: #{bert_forward.19} parent=0 // pred_region
    %vm19 = vcmask 261120
    %20 = vst.msk [vmem:[#allocation2] sm:$0xff] %vm19, 0.0
  $region17: #{bert_forward.19} parent=0 // pred_fallthru
    _
  %v21 = vld [vmem:[#allocation2] sm:$0xff]
  %v22 = vld [vmem:[%s0] sm:$0xf]
  %v23 = vld [vmem:[%s1] sm:$0xf]
  %v24 = vld [vmem:[%s1 + $0x4] sm:$0xf]
  %v25 = vld [vmem:[%s1 + $0x8] sm:$0xf]
  %v26 = vld [vmem:[%s1 + $0xc] sm:$0xf]
  %v31 = vunpack.c.l.b16 %v23
  %v32 = vunpack.c.l.b16 %v24
  %v33 = vunpack.c.l.b16 %v25
  %v34 = vunpack.c.l.b16 %v26
  %v35 = vpack.c.b16 %v32, %v31
  %v36 = vpack.c.b16 %v34, %v33
  %vm39 = vcmask 261120
  %v41 = vsel %vm39, %v22, 0
  %43 = vmatprep.subr.bf16.mxu0 0
  %44 = vmatpush1.bf16.msra.mxu0 %v35
  %45 = vmatprep.subr.bf16.mxu0 0
  %46 = vmatpush1.bf16.msra.mxu0 %v36
  %47 = vmatprep.subr.bf16.mxu0 0
  %48 = vmatpush1.bf16.msra.mxu0 0
  %49 = vmatprep.subr.bf16.mxu0 0
  %50 = vmatpush1.bf16.msra.mxu0 0
  %51 = vmatprep.subr.bf16.mxu0 0
  %52 = vmatpush1.bf16.msra.mxu0 0
  %53 = vmatprep.subr.bf16.mxu0 0
  %54 = vmatpush1.bf16.msra.mxu0 0
  %55 = vmatprep.subr.bf16.mxu0 0
  %56 = vmatpush1.bf16.msra.mxu0 0
  %57 = vmatprep.subr.bf16.mxu0 0
  %58 = vmatpush1.bf16.msra.mxu0 0
  %59 = vmatprep.subr.bf16.mxu0 0
  %60 = vmatpush1.bf16.msra.mxu0 0
  %61 = vmatprep.subr.bf16.mxu0 0
  %62 = vmatpush1.bf16.msra.mxu0 0
  %63 = vmatprep.subr.bf16.mxu0 0
  %64 = vmatpush1.bf16.msra.mxu0 0
  %65 = vmatprep.subr.bf16.mxu0 0
  %66 = vmatpush1.bf16.msra.mxu0 0
  %67 = vmatprep.subr.bf16.mxu0 0
  %68 = vmatpush1.bf16.msra.mxu0 0
  %69 = vmatprep.subr.bf16.mxu0 0
  %70 = vmatpush1.bf16.msra.mxu0 0
  %71 = vmatprep.subr.bf16.mxu0 0
  %72 = vmatpush1.bf16.msra.mxu0 0
  %73 = vmatprep.subr.bf16.mxu0 0
  %74 = vmatpush1.bf16.msra.mxu0 0
  %75 = vmatprep.mubr.bf16.mxu0 0
  %76 = vmatmul.mubr.bf16.gmra.mrb[0].mxu0 %v41
  %v77 = vpop.f32.mrb[0].mxu0
  %v78 = vadd.f32 0.0, %v77
  %v79 = vpop.f32.mrb[0].mxu0
  %v80 = vpop.f32.mrb[0].mxu0
  %v81 = vpop.f32.mrb[0].mxu0
  %82 = vdwg.mxu0
  %v83 = vadd.f32 %v21, %v78
  %84 = vst.msk [vmem:[#allocation2] sm:$0xff] %vm39, %v83
  // Predicated region
  $region18: #{bert_forward.19} parent=0 // pred_check
    %p85 = pneg %p15
  $region19: #{bert_forward.19} parent=0 // pred_check_branch
    %87 = sbr.rel (%p85) target = $region21
  $region20: #{bert_forward.19} parent=0 // pred_region
    %v88 = vld [vmem:[#allocation2] sm:$0xff]
    %v89 = vld [vmem:[%s2] sm:$0x1]
    %v91 = vlaneseq
    %v92 = vshrl.u32 %v91, 7
    %v93 = vsub.s32 0, %v92
    %v94 = vrot.slane %v89, %v93
    %v96 = vadd.f32 %v88, %v94
    %v97 = vmul.f32 %v96, 0.5
    %v98 = vmul.f32 %v96, 0.044715
    %v99 = vmul.f32 %v98, %v96
    %v100 = vmul.f32 %v99, %v96
    %v101 = vadd.f32 %v96, %v100
    %v102 = vmul.f32 %v101, 0.7978846
    %v103 = vtanh.pop %v102
    %v104 = vadd.f32 %v103, 1.0
    %v105 = vmul.f32 %v97, %v104
    %v106 = vpack.c.bf16 %v105, %v105
    %vm107 = vcmask 257024
    %108 = vst.msk [vmem:[%s3] sm:$0xf] %vm107, %v106
  $region21: #{bert_forward.19} parent=0 // pred_fallthru
    _
  // Predicated region
  $region22: #{bert_forward.19} parent=0 // pred_check
    _
  $region23: #{bert_forward.19} parent=0 // pred_check_branch
    %110 = sbr.rel (0) target = $region25
  $region24: #{bert_forward.19} parent=0 // pred_region
    _
  $region25: #{bert_forward.19} parent=0 // pred_fallthru
    _
  // Predicated region
  $region26: #{bert_forward.19} parent=0 // pred_check
    _
  $region27: #{bert_forward.19} parent=0 // pred_check_branch
    %112 = sbr.rel (0) target = $region29
  $region28: #{bert_forward.19} parent=0 // pred_region
    _
  $region29: #{bert_forward.19} parent=0 // pred_fallthru
    _

// kernel: bert_forward.21
$region0: #{bert_forward.21}
  #allocation0 [shape = 'u32[]', space=smem, size = 0x4, offset = 0x4, fixed_abs, tag = 'smem constant byte address 0x4 - core index']
  #allocation1 [shape = 'u32[144,128]{1,0:T(1,128)}', space=vmem, size = 0x12000, scoped, tag = 'internal scratch']
  #allocation2 [shape = 'f32[8,64]{1,0:T(8,128)}', space=vmem, size = 0x1000, scoped, tag = 'scratch operand']
  %s0 = inlined_call_operand.vmem [shape: bf16[8,32], index: 0, kind: input, shape index: {}]
  %s1 = inlined_call_operand.vmem [shape: bf16[64,32], index: 1, kind: input, shape index: {}]
  %s2 = inlined_call_operand.vmem [shape: f32[1,64], index: 2, kind: input, shape index: {}]
  %s3 = inlined_call_operand.hbm [shape: f32[8,64], index: 3, kind: output, shape index: {}]
  %s4 = sld [smem:[#allocation0]]
  $region30: #{bert_forward.21} parent=0
    _
  %s6 = ssub.s32 1, %s4
  %s7 = scalar_select 0, %s6, %s4
  $region1: #{bert_forward.21} parent=0
    #allocation3 [shape = 'u8[4096]{0}', space=vmem, size = 0x1000, scoped, tag = 'output window, operand 0, single buffered']
    #allocation4 [shape = 's32[1]{0}', space=sflag, size = 0x4, scoped, tag = 'scoped memory for bert_forward.21']
    %8 = vsyncpa [#allocation4], 0
    // Predicated region
    $region2: #{bert_forward.21} parent=1 // pred_check
      _
    $region3: #{bert_forward.21} parent=1 // pred_check_branch
      %10 = sbr.rel (0) target = $region5
    $region4: #{bert_forward.21} parent=1 // pred_region
      _
    $region5: #{bert_forward.21} parent=1 // pred_fallthru
      _
    // Predicated region
    $region6: #{bert_forward.21} parent=1 // pred_check
      _
    $region7: #{bert_forward.21} parent=1 // pred_check_branch
      %12 = sbr.rel (0) target = $region9
    $region8: #{bert_forward.21} parent=1 // pred_region
      _
    $region9: #{bert_forward.21} parent=1 // pred_fallthru
      _
    // Predicated region
    $region10: #{bert_forward.21} parent=1 // pred_check
      _
    $region11: #{bert_forward.21} parent=1 // pred_check_branch
      %14 = sbr.rel (0) target = $region13
    $region12: #{bert_forward.21} parent=1 // pred_region
      _
    $region13: #{bert_forward.21} parent=1 // pred_fallthru
      _
    %p16 = scmp.eq.s32.totalorder 0, 0
    // Predicated region
    $region14: #{bert_forward.21} parent=1 // pred_check
      %p17 = pneg %p16
    $region15: #{bert_forward.21} parent=1 // pred_check_branch
      %19 = sbr.rel (%p17) target = $region17
    $region16: #{bert_forward.21} parent=1 // pred_region
      %vm20 = vcmask 523264
      %21 = vst.msk [vmem:[#allocation2] sm:$0xff] %vm20, 0.0
    $region17: #{bert_forward.21} parent=1 // pred_fallthru
      _
    %v22 = vld [vmem:[#allocation2] sm:$0xff]
    %v23 = vld [vmem:[%s0] sm:$0xf]
    %v24 = vld [vmem:[%s1] sm:$0xf]
    %v25 = vld [vmem:[%s1 + $0x4] sm:$0xf]
    %v26 = vld [vmem:[%s1 + $0x8] sm:$0xf]
    %v27 = vld [vmem:[%s1 + $0xc] sm:$0xf]
    %v28 = vld [vmem:[%s1 + $0x10] sm:$0xf]
    %v29 = vld [vmem:[%s1 + $0x14] sm:$0xf]
    %v30 = vld [vmem:[%s1 + $0x18] sm:$0xf]
    %v31 = vld [vmem:[%s1 + $0x1c] sm:$0xf]
    %v40 = vunpack.c.l.b16 %v24
    %v41 = vunpack.c.l.b16 %v25
    %v42 = vunpack.c.l.b16 %v26
    %v43 = vunpack.c.l.b16 %v27
    %v44 = vunpack.c.l.b16 %v28
    %v45 = vunpack.c.l.b16 %v29
    %v46 = vunpack.c.l.b16 %v30
    %v47 = vunpack.c.l.b16 %v31
    %v48 = vpack.c.b16 %v41, %v40
    %v49 = vpack.c.b16 %v43, %v42
    %v50 = vpack.c.b16 %v45, %v44
    %v51 = vpack.c.b16 %v47, %v46
    %vm52 = vcmask 261120
    %v54 = vsel %vm52, %v23, 0
    %v57 = vsel %vm52, %v48, 0
    %v60 = vsel %vm52, %v49, 0
    %v63 = vsel %vm52, %v50, 0
    %v66 = vsel %vm52, %v51, 0
    %68 = vmatprep.subr.bf16.mxu0 0
    %69 = vmatpush1.bf16.xpose.msra.mxu0 %v57
    %70 = vmatprep.subr.bf16.mxu0 0
    %71 = vmatpush1.bf16.xpose.msra.mxu0 %v60
    %72 = vmatprep.subr.bf16.mxu0 0
    %73 = vmatpush1.bf16.xpose.msra.mxu0 %v63
    %74 = vmatprep.subr.bf16.mxu0 0
    %75 = vmatpush1.bf16.xpose.msra.mxu0 %v66
    %76 = vmatprep.subr.bf16.mxu0 0
    %77 = vmatpush1.bf16.xpose.msra.mxu0 0
    %78 = vmatprep.subr.bf16.mxu0 0
    %79 = vmatpush1.bf16.xpose.msra.mxu0 0
    %80 = vmatprep.subr.bf16.mxu0 0
    %81 = vmatpush1.bf16.xpose.msra.mxu0 0
    %82 = vmatprep.subr.bf16.mxu0 0
    %83 = vmatpush1.bf16.xpose.msra.mxu0 0
    %84 = vmatprep.subr.bf16.mxu0 0
    %85 = vmatpush1.bf16.xpose.msra.mxu0 0
    %86 = vmatprep.subr.bf16.mxu0 0
    %87 = vmatpush1.bf16.xpose.msra.mxu0 0
    %88 = vmatprep.subr.bf16.mxu0 0
    %89 = vmatpush1.bf16.xpose.msra.mxu0 0
    %90 = vmatprep.subr.bf16.mxu0 0
    %91 = vmatpush1.bf16.xpose.msra.mxu0 0
    %92 = vmatprep.subr.bf16.mxu0 0
    %93 = vmatpush1.bf16.xpose.msra.mxu0 0
    %94 = vmatprep.subr.bf16.mxu0 0
    %95 = vmatpush1.bf16.xpose.msra.mxu0 0
    %96 = vmatprep.subr.bf16.mxu0 0
    %97 = vmatpush1.bf16.xpose.msra.mxu0 0
    %98 = vmatprep.subr.bf16.mxu0 0
    %99 = vmatpush1.bf16.xpose.msra.mxu0 0
    %100 = vmatprep.mubr.bf16.mxu0 0
    %101 = vmatmul.mubr.bf16.gmra.mrb[0].mxu0 %v54
    %v102 = vpop.f32.mrb[0].mxu0
    %v103 = vadd.f32 0.0, %v102
    %v104 = vpop.f32.mrb[0].mxu0
    %v105 = vpop.f32.mrb[0].mxu0
    %v106 = vpop.f32.mrb[0].mxu0
    %107 = vdwg.mxu0
    %v108 = vadd.f32 %v22, %v103
    %vm109 = vcmask 523264
    %110 = vst.msk [vmem:[#allocation2] sm:$0xff] %vm109, %v108
    // Predicated region
    $region18: #{bert_forward.21} parent=1 // pred_check
      %p111 = pneg %p16
    $region19: #{bert_forward.21} parent=1 // pred_check_branch
      %113 = sbr.rel (%p111) target = $region21
    $region20: #{bert_forward.21} parent=1 // pred_region
      %v114 = vld [vmem:[#allocation2] sm:$0xff]
      %v115 = vld [vmem:[%s2] sm:$0x1]
      %v117 = vlaneseq
      %v118 = vshrl.u32 %v117, 7
      %v119 = vsub.s32 0, %v118
      %v120 = vrot.slane %v115, %v119
      %v122 = vadd.f32 %v114, %v120
      %123 = vst.msk [vmem:[#allocation3] sm:$0xff] %vm109, %v122
    $region21: #{bert_forward.21} parent=1 // pred_fallthru
      _
    // Predicated region
    $region22: #{bert_forward.21} parent=1 // pred_check
      _
    $region23: #{bert_forward.21} parent=1 // pred_check_branch
      %125 = sbr.rel (0) target = $region25
    $region24: #{bert_forward.21} parent=1 // pred_region
      %s127 = ssub.s32 128, 128
      %128 = vsyncadd [#allocation4], %s127
      %s130 = sshll.u32 [#allocation3], 4
      %s131 = int_to_ptr.vmem [resolvable:$true] %s130
      %133 = dma.vmem_to_hbm [thread:$0]  %s131, 128, %s3, [#allocation4]
    $region25: #{bert_forward.21} parent=1 // pred_fallthru
      _
    // Predicated region
    $region26: #{bert_forward.21} parent=1 // pred_check
      _
    $region27: #{bert_forward.21} parent=1 // pred_check_branch
      %135 = sbr.rel (0) target = $region29
    $region28: #{bert_forward.21} parent=1 // pred_region
      %136 = dma.done [#allocation4], 128
    $region29: #{bert_forward.21} parent=1 // pred_fallthru
      _
    %137 = vsyncpa [#allocation4], 1

// kernel: bert_forward.20
$region0: #{bert_forward.20}
  #allocation0 [shape = 'u32[]', space=smem, size = 0x4, offset = 0x4, fixed_abs, tag = 'smem constant byte address 0x4 - core index']
  #allocation1 [shape = 'u32[144,128]{1,0:T(1,128)}', space=vmem, size = 0x12000, scoped, tag = 'internal scratch']
  %s0 = inlined_call_operand.vmem [shape: bf16[8,32], index: 0, kind: input, shape index: {}]
  %s1 = inlined_call_operand.vmem [shape: f32[1,32], index: 1, kind: input, shape index: {}]
  %s2 = inlined_call_operand.vmem [shape: f32[1,32], index: 2, kind: input, shape index: {}]
  %s3 = inlined_call_operand.vmem [shape: bf16[8,32], index: 3, kind: output, shape index: {}]
  %s4 = sld [smem:[#allocation0]]
  $region22: #{bert_forward.20} parent=0
    _
  %s6 = ssub.s32 1, %s4
  %s7 = scalar_select 0, %s6, %s4
  // Predicated region
  $region2: #{bert_forward.20} parent=0 // pred_check
    _
  $region3: #{bert_forward.20} parent=0 // pred_check_branch
    %9 = sbr.rel (0) target = $region5
  $region4: #{bert_forward.20} parent=0 // pred_region
    _
  $region5: #{bert_forward.20} parent=0 // pred_fallthru
    _
  // Predicated region
  $region6: #{bert_forward.20} parent=0 // pred_check
    _
  $region7: #{bert_forward.20} parent=0 // pred_check_branch
    %11 = sbr.rel (0) target = $region9
  $region8: #{bert_forward.20} parent=0 // pred_region
    _
  $region9: #{bert_forward.20} parent=0 // pred_fallthru
    _
  // Predicated region
  $region10: #{bert_forward.20} parent=0 // pred_check
    _
  $region11: #{bert_forward.20} parent=0 // pred_check_branch
    %13 = sbr.rel (0) target = $region13
  $region12: #{bert_forward.20} parent=0 // pred_region
    _
  $region13: #{bert_forward.20} parent=0 // pred_fallthru
    _
  %v14 = vld [vmem:[%s0] sm:$0xf]
  %v15 = vunpack.c.l.bf16 %v14
  %vm16 = vcmask 261120
  %v17 = vsel %vm16, %v15, 0.0
  %18 = vadd.xlane.f32.xlu0 %v17
  %v19 = vpop.xlane.xlu0 %18
  %v20 = vrcp.pop 32.0
  %v21 = vmul.f32 %v19, %v20
  %v22 = vsub.f32 %v15, %v21
  %v23 = vmul.f32 %v22, %v22
  %v24 = vsel %vm16, %v23, 0.0
  %25 = vadd.xlane.f32.xlu0 %v24
  %v26 = vpop.xlane.xlu0 %25
  %v27 = vmul.f32 %v26, %v20
  %v28 = vadd.f32 %v27, 1e-05
  %v29 = vrsqrt.pop %v28
  %v30 = vmul.f32 %v22, %v29
  %v31 = vld [vmem:[%s1] sm:$0x1]
  %v33 = vlaneseq
  %v34 = vshrl.u32 %v33, 7
  %v35 = vsub.s32 0, %v34
  %v36 = vrot.slane %v31, %v35
  %v38 = vmul.f32 %v30, %v36
  %v39 = vld [vmem:[%s2] sm:$0x1]
  %v41 = vlaneseq
  %v42 = vshrl.u32 %v41, 7
  %v43 = vsub.s32 0, %v42
  %v44 = vrot.slane %v39, %v43
  %v46 = vadd.f32 %v38, %v44
  %v47 = vpack.c.bf16 %v46, %v46
  %vm48 = vcmask 257024
  %49 = vst.msk [vmem:[%s3] sm:$0xf] %vm48, %v47
  // Predicated region
  $region14: #{bert_forward.20} parent=0 // pred_check
    _
  $region15: #{bert_forward.20} parent=0 // pred_check_branch
    %51 = sbr.rel (0) target = $region17
  $region16: #{bert_forward.20} parent=0 // pred_region
    _
  $region17: #{bert_forward.20} parent=0 // pred_fallthru
    _
  // Predicated region
  $region18: #{bert_forward.20} parent=0 // pred_check
    _
  $region19: #{bert_forward.20} parent=0 // pred_check_branch
    %53 = sbr.rel (0) target = $region21
  $region20: #{bert_forward.20} parent=0 // pred_region
    _
  $region21: #{bert_forward.20} parent=0 // pred_fallthru
    _

</llo_original>
